<compile_context>
chip_gen: v6e
topology: v6e:2x2x1
jax: 0.10.0
libtpu: 0.0.40
codegen_flags: <defaults>
</compile_context>

<pallas_src>
import functools

import jax
import jax.numpy as jnp
from jax.experimental import pallas as pl
from jax.experimental.pallas import tpu as pltpu

Ks = (2, 3, 4)        # conv kernel widths, as in the PyTorch module
KMAX = max(Ks)
NB = len(Ks)
Co = 100              # conv output channels, as in the PyTorch module
COP = 128             # Co padded to lane width (also used for padded C)


def _gcae_kernel(x_ref, asp_ref, w_ref, aw_ref, bias_ref, fc1_ref, out_ref,
                 *, L, Lp, Bt):
    x = x_ref[...]                                             # (Bt*Lp, KMAX*D) bf16

    # aspect projection: one small MXU pass shared by all conv branches
    asp = jnp.dot(asp_ref[...], aw_ref[...],
                  preferred_element_type=jnp.float32)          # (Bt, COP) f32
    asp3 = asp[:, None, :]                                     # (Bt, 1, COP)

    acc = jnp.zeros((Bt, COP), jnp.float32)
    for i, K in enumerate(Ks):
        Lout = L - K + 1
        # one 256-lane-wide dot per K: [conv1_K | conv2_K] columns, taps>=K zeroed
        res = jnp.dot(x, w_ref[:, i * 2 * COP:(i + 1) * 2 * COP],
                      preferred_element_type=jnp.float32)      # (Bt*Lp, 2*COP) f32
        # per-sentence view; static slice to valid time rows BEFORE gate math
        blk = res.reshape(Bt, Lp, 2 * COP)[:, :Lout, :]
        c1 = blk[:, :, :COP]
        c2 = blk[:, :, COP:]
        xg = jnp.tanh(c1 + bias_ref[i:i + 1, :].reshape(1, 1, COP))
        yg = jnp.maximum(
            c2 + bias_ref[NB + i:NB + i + 1, :].reshape(1, 1, COP) + asp3, 0.0)
        pooled = jnp.max(xg * yg, axis=1)                      # (Bt, COP) max-pool
        # fc1 contribution of this branch (f32 epilogue, no concat / no cast)
        acc = acc + jnp.dot(pooled, fc1_ref[i * COP:(i + 1) * COP, :],
                            preferred_element_type=jnp.float32)
    out_ref[...] = acc + bias_ref[2 * NB:2 * NB + 1, :]        # + fc1 bias


def init_params(key, vocab_size, D, C, A):
    ks = jax.random.split(key, 24)

    def nrm(k, shape, s=0.1):
        return (jax.random.normal(k, shape) * s).astype(jnp.float32)

    p = {}
    p["word_embed"] = nrm(ks[0], (vocab_size, D))
    p["AE"] = nrm(ks[1], (A, D))
    for i, K in enumerate(Ks):
        p[f"conv1_w_{K}"] = nrm(ks[2 + i], (Co, D, K))   # PyTorch Conv1d layout
        p[f"conv1_b_{K}"] = nrm(ks[5 + i], (Co,))
        p[f"conv2_w_{K}"] = nrm(ks[8 + i], (Co, D, K))
        p[f"conv2_b_{K}"] = nrm(ks[11 + i], (Co,))
    p["fc_aspect_w"] = nrm(ks[14], (Co, D))              # PyTorch Linear (out, in)
    p["fc_aspect_b"] = nrm(ks[15], (Co,))
    p["fc1_w"] = nrm(ks[16], (C, NB * Co))
    p["fc1_b"] = nrm(ks[17], (C,))
    return p


def prepare_params(params):
    """One-time re-layout of PyTorch-layout weights into MXU-ready slabs."""
    D = params["word_embed"].shape[1]
    C = params["fc1_w"].shape[0]
    KD = KMAX * D
    assert Co <= COP and C <= COP

    def conv_block(w):                                    # (Co, D, K) -> (KD, COP)
        K = w.shape[2]
        wt = jnp.transpose(w, (2, 1, 0)).reshape(K * D, Co)
        return jnp.zeros((KD, COP), jnp.float32).at[:K * D, :Co].set(wt)

    cols = []
    for K in Ks:                                          # interleave per-K pairs
        cols.append(conv_block(params[f"conv1_w_{K}"]))
        cols.append(conv_block(params[f"conv2_w_{K}"]))
    w_slab = jnp.concatenate(cols, axis=1).astype(jnp.bfloat16)    # (KD, 6*COP)

    aw_slab = (jnp.zeros((D, COP), jnp.float32)
               .at[:, :Co].set(params["fc_aspect_w"].T)
               .astype(jnp.bfloat16))                              # (D, COP)

    def padco(b):
        return jnp.pad(b, (0, COP - b.shape[0])).reshape(1, COP)

    # rows 0..2: conv1 biases; 3..5: conv2 + fc_aspect biases; 6: fc1 bias; 7: 0
    bias_slab = jnp.concatenate(
        [padco(params[f"conv1_b_{K}"]) for K in Ks]
        + [padco(params[f"conv2_b_{K}"] + params["fc_aspect_b"]) for K in Ks]
        + [padco(params["fc1_b"]), jnp.zeros((1, COP), jnp.float32)],
        axis=0)                                                    # (8, COP) f32

    fc1_wT = params["fc1_w"].T                                     # (NB*Co, C)
    fc1_slab = jnp.zeros((NB * COP, COP), jnp.float32)
    for i in range(NB):
        fc1_slab = fc1_slab.at[i * COP:i * COP + Co, :C].set(
            fc1_wT[i * Co:(i + 1) * Co, :])                        # f32 epilogue

    return {"word_embed": params["word_embed"], "AE": params["AE"],
            "w_slab": w_slab, "aw_slab": aw_slab,
            "bias_slab": bias_slab, "fc1_slab": fc1_slab}


@functools.partial(jax.jit, static_argnames=("out_dim", "batch_tile"))
def gcae_forward(prepped, sentences, aspect_idx, *, out_dim, batch_tile=8):
    """Batched GCAE forward. sentences: (B, L) int32, aspect_idx: (B,) int32."""
    B, L = sentences.shape
    assert L >= KMAX, "sentences must have at least KMAX=4 tokens"
    D = prepped["word_embed"].shape[1]
    KD = KMAX * D
    Bt = batch_tile
    Lp = ((L + KMAX - 1) + 7) // 8 * 8     # per-sentence rows incl. conv tail pad
    Bp = (B + Bt - 1) // Bt * Bt           # batch padded to the block tile

    # --- XLA glue: embedding gathers + bf16 im2col slab (layout only) ---
    feat = prepped["word_embed"][sentences].astype(jnp.bfloat16)        # (B, L, D)
    aspv = prepped["AE"][aspect_idx.reshape(-1)].astype(jnp.bfloat16)   # (B, D)
    feat = jnp.pad(feat, ((0, Bp - B), (0, Lp - L), (0, 0)))
    aspv = jnp.pad(aspv, ((0, Bp - B), (0, 0)))
    x_slab = jnp.concatenate(
        [jnp.pad(feat[:, k:, :], ((0, 0), (0, k), (0, 0))) for k in range(KMAX)],
        axis=2).reshape(Bp * Lp, KD)                                    # bf16

    sum_lout = sum(L - K + 1 for K in Ks)
    cost = pl.CostEstimate(
        flops=(2 * Bp * Lp * KD * (2 * NB * COP)        # fused conv dots
               + 2 * Bp * D * COP                       # aspect projection
               + 2 * Bp * NB * COP * COP),              # fc1 epilogue
        transcendentals=Bp * sum_lout * COP,            # tanh gate
        bytes_accessed=(x_slab.size * 2 + aspv.size * 2
                        + prepped["w_slab"].size * 2 + prepped["aw_slab"].size * 2
                        + prepped["bias_slab"].size * 4
                        + prepped["fc1_slab"].size * 4 + Bp * COP * 4))

    out = pl.pallas_call(
        functools.partial(_gcae_kernel, L=L, Lp=Lp, Bt=Bt),
        out_shape=jax.ShapeDtypeStruct((Bp, COP), jnp.float32),
        grid_spec=pltpu.PrefetchScalarGridSpec(
            num_scalar_prefetch=0,
            grid=(Bp // Bt,),
            in_specs=[
                pl.BlockSpec((Bt * Lp, KD), lambda b: (b, 0)),       # im2col X
                pl.BlockSpec((Bt, D), lambda b: (b, 0)),             # aspect rows
                pl.BlockSpec((KD, 2 * NB * COP), lambda b: (0, 0)),  # fused conv W
                pl.BlockSpec((D, COP), lambda b: (0, 0)),            # fc_aspect W
                pl.BlockSpec((8, COP), lambda b: (0, 0)),            # bias slab
                pl.BlockSpec((NB * COP, COP), lambda b: (0, 0)),     # fc1 W
            ],
            out_specs=pl.BlockSpec((Bt, COP), lambda b: (b, 0)),
        ),
        compiler_params=pltpu.CompilerParams(
            dimension_semantics=("parallel",)),       # shard over both TCs on v7x
        cost_estimate=cost,
    )(x_slab, aspv, prepped["w_slab"], prepped["aw_slab"],
      prepped["bias_slab"], prepped["fc1_slab"])
    return out[:B, :out_dim]


def gcae_reference(params, sentences, aspect_idx):
    # Pure-JAX reference mirroring the PyTorch forward, per sentence (f32).
    outs = []
    for b in range(int(sentences.shape[0])):
        feat = params["word_embed"][sentences[b]]                   # (L, D)
        asp_v = params["AE"][aspect_idx[b]][None, :]                # (1, D)
        asp_proj = asp_v @ params["fc_aspect_w"].T + params["fc_aspect_b"]
        L = feat.shape[0]
        pooled = []
        for K in Ks:
            w1, b1 = params[f"conv1_w_{K}"], params[f"conv1_b_{K}"]
            w2, b2 = params[f"conv2_w_{K}"], params[f"conv2_b_{K}"]
            Lout = L - K + 1
            c1 = jnp.zeros((Lout, Co), jnp.float32)
            c2 = jnp.zeros((Lout, Co), jnp.float32)
            for k in range(K):
                c1 = c1 + feat[k:k + Lout] @ w1[:, :, k].T
                c2 = c2 + feat[k:k + Lout] @ w2[:, :, k].T
            xg = jnp.tanh(c1 + b1)
            yg = jax.nn.relu(c2 + b2 + asp_proj)
            pooled.append(jnp.max(xg * yg, axis=0, keepdims=True))
        cat = jnp.concatenate(pooled, axis=1)                       # (1, 3*Co)
        outs.append(cat @ params["fc1_w"].T + params["fc1_b"])
    return jnp.concatenate(outs, axis=0)


if __name__ == "__main__":
    key = jax.random.PRNGKey(0)
    vocab_size, word_embed_dim, output_size, aspect_size = 50, 32, 3, 5
    batch, seq_len = 16, 16

    kp, ksd, kad = jax.random.split(key, 3)
    params = init_params(kp, vocab_size, word_embed_dim, output_size, aspect_size)
    sentences = jax.random.randint(ksd, (batch, seq_len), 0, vocab_size,
                                   dtype=jnp.int32)
    aspect_idx = jax.random.randint(kad, (batch,), 0, aspect_size,
                                    dtype=jnp.int32)

    prepped = prepare_params(params)          # one-time weight re-layout
    logits = gcae_forward(prepped, sentences, aspect_idx,
                          out_dim=output_size, batch_tile=8)
    jax.block_until_ready(logits)

    ref = gcae_reference(params, sentences, aspect_idx)
    assert logits.shape == (batch, output_size), logits.shape
    assert jnp.allclose(logits, ref, atol=2e-2, rtol=2e-2), (logits, ref)
    print("KERNEL_OK")
</pallas_src>

<mosaic_0001>
module attributes {stable_mosaic.version = 11 : i64} {
  func.func @_gcae_kernel(%arg0: i32, %arg1: memref<192x128xbf16, #tpu.memory_space<vmem>>, %arg2: memref<8x32xbf16, #tpu.memory_space<vmem>>, %arg3: memref<128x768xbf16, #tpu.memory_space<vmem>>, %arg4: memref<32x128xbf16, #tpu.memory_space<vmem>>, %arg5: memref<8x128xf32, #tpu.memory_space<vmem>>, %arg6: memref<384x128xf32, #tpu.memory_space<vmem>>, %arg7: memref<8x128xf32, #tpu.memory_space<vmem>>) attributes {dimension_semantics = [#tpu.dimension_semantics<parallel>], iteration_bounds = array<i64: 2>, scalar_prefetch = 0 : i64, scratch_operands = 0 : i64, tpu.core_type = #tpu.core_type<tc>, window_params = [{transform_indices = @transform_0, window_bounds = array<i64: 192, 128>}, {transform_indices = @transform_1, window_bounds = array<i64: 8, 32>}, {pipeline_mode = #tpu.pipeline_mode<synchronous>, transform_indices = @transform_2, window_bounds = array<i64: 128, 768>}, {pipeline_mode = #tpu.pipeline_mode<synchronous>, transform_indices = @transform_3, window_bounds = array<i64: 32, 128>}, {pipeline_mode = #tpu.pipeline_mode<synchronous>, transform_indices = @transform_4, window_bounds = array<i64: 8, 128>}, {pipeline_mode = #tpu.pipeline_mode<synchronous>, transform_indices = @transform_5, window_bounds = array<i64: 384, 128>}, {transform_indices = @transform_6, window_bounds = array<i64: 8, 128>}]} {
    %c0 = arith.constant 0 : index
    %c0_0 = arith.constant 0 : index
    %0 = vector.load %arg1[%c0, %c0_0] : memref<192x128xbf16, #tpu.memory_space<vmem>>, vector<192x128xbf16>
    %c0_1 = arith.constant 0 : index
    %c0_2 = arith.constant 0 : index
    %1 = vector.load %arg2[%c0_1, %c0_2] : memref<8x32xbf16, #tpu.memory_space<vmem>>, vector<8x32xbf16>
    %c0_3 = arith.constant 0 : index
    %c0_4 = arith.constant 0 : index
    %2 = vector.load %arg4[%c0_3, %c0_4] : memref<32x128xbf16, #tpu.memory_space<vmem>>, vector<32x128xbf16>
    %cst = arith.constant dense<0.000000e+00> : vector<8x128xf32>
    %3 = tpu.matmul %1, %2, %cst {dimension_numbers = #tpu.dot_dimension_numbers<[1], [0], [0], [1], [0, 0, 1, 1], [], []>} : vector<8x32xbf16>, vector<32x128xbf16>, vector<8x128xf32> -> vector<8x128xf32>
    %4 = vector.shape_cast %3 : vector<8x128xf32> to vector<8x1x128xf32>
    %cst_5 = arith.constant 0.000000e+00 : f32
    %5 = vector.broadcast %cst_5 : f32 to vector<8x128xf32>
    %c0_6 = arith.constant 0 : index
    %c0_7 = arith.constant 0 : index
    %6 = vector.load %arg3[%c0_6, %c0_7] : memref<128x768xbf16, #tpu.memory_space<vmem>>, vector<128x256xbf16>
    %cst_8 = arith.constant dense<0.000000e+00> : vector<192x256xf32>
    %7 = tpu.matmul %0, %6, %cst_8 {dimension_numbers = #tpu.dot_dimension_numbers<[1], [0], [0], [1], [0, 0, 1, 1], [], []>} : vector<192x128xbf16>, vector<128x256xbf16>, vector<192x256xf32> -> vector<192x256xf32>
    %8 = vector.shape_cast %7 : vector<192x256xf32> to vector<8x24x256xf32>
    %9 = vector.extract_strided_slice %8 {offsets = [0, 0, 0], sizes = [8, 15, 256], strides = [1, 1, 1]} : vector<8x24x256xf32> to vector<8x15x256xf32>
    %10 = vector.extract_strided_slice %9 {offsets = [0, 0, 0], sizes = [8, 15, 128], strides = [1, 1, 1]} : vector<8x15x256xf32> to vector<8x15x128xf32>
    %11 = vector.extract_strided_slice %9 {offsets = [0, 0, 128], sizes = [8, 15, 128], strides = [1, 1, 1]} : vector<8x15x256xf32> to vector<8x15x128xf32>
    %c0_9 = arith.constant 0 : index
    %c0_10 = arith.constant 0 : index
    %12 = vector.load %arg5[%c0_9, %c0_10] : memref<8x128xf32, #tpu.memory_space<vmem>>, vector<1x128xf32>
    %13 = vector.shape_cast %12 : vector<1x128xf32> to vector<1x1x128xf32>
    %14 = vector.broadcast %13 : vector<1x1x128xf32> to vector<8x15x128xf32>
    %15 = arith.addf %10, %14 : vector<8x15x128xf32>
    %16 = math.tanh %15 : vector<8x15x128xf32>
    %c3 = arith.constant 3 : index
    %c0_11 = arith.constant 0 : index
    %17 = vector.load %arg5[%c3, %c0_11] : memref<8x128xf32, #tpu.memory_space<vmem>>, vector<1x128xf32>
    %18 = vector.shape_cast %17 : vector<1x128xf32> to vector<1x1x128xf32>
    %19 = vector.broadcast %18 : vector<1x1x128xf32> to vector<8x15x128xf32>
    %20 = arith.addf %11, %19 : vector<8x15x128xf32>
    %21 = vector.broadcast %4 : vector<8x1x128xf32> to vector<8x15x128xf32>
    %22 = arith.addf %20, %21 : vector<8x15x128xf32>
    %cst_12 = arith.constant 0.000000e+00 : f32
    %23 = vector.broadcast %cst_12 : f32 to vector<8x15x128xf32>
    %24 = arith.maximumf %22, %23 : vector<8x15x128xf32>
    %25 = arith.mulf %16, %24 : vector<8x15x128xf32>
    %cst_13 = arith.constant dense<0xFF800000> : vector<8x128xf32>
    %26 = vector.multi_reduction <maximumf>, %25, %cst_13 [1] : vector<8x15x128xf32> to vector<8x128xf32>
    %c0_14 = arith.constant 0 : index
    %c0_15 = arith.constant 0 : index
    %27 = vector.load %arg6[%c0_14, %c0_15] : memref<384x128xf32, #tpu.memory_space<vmem>>, vector<128x128xf32>
    %cst_16 = arith.constant dense<0.000000e+00> : vector<8x128xf32>
    %28 = tpu.matmul %26, %27, %cst_16 {dimension_numbers = #tpu.dot_dimension_numbers<[1], [0], [0], [1], [0, 0, 1, 1], [], []>} : vector<8x128xf32>, vector<128x128xf32>, vector<8x128xf32> -> vector<8x128xf32>
    %29 = arith.addf %5, %28 : vector<8x128xf32>
    %c0_17 = arith.constant 0 : index
    %c256 = arith.constant 256 : index
    %30 = vector.load %arg3[%c0_17, %c256] : memref<128x768xbf16, #tpu.memory_space<vmem>>, vector<128x256xbf16>
    %cst_18 = arith.constant dense<0.000000e+00> : vector<192x256xf32>
    %31 = tpu.matmul %0, %30, %cst_18 {dimension_numbers = #tpu.dot_dimension_numbers<[1], [0], [0], [1], [0, 0, 1, 1], [], []>} : vector<192x128xbf16>, vector<128x256xbf16>, vector<192x256xf32> -> vector<192x256xf32>
    %32 = vector.shape_cast %31 : vector<192x256xf32> to vector<8x24x256xf32>
    %33 = vector.extract_strided_slice %32 {offsets = [0, 0, 0], sizes = [8, 14, 256], strides = [1, 1, 1]} : vector<8x24x256xf32> to vector<8x14x256xf32>
    %34 = vector.extract_strided_slice %33 {offsets = [0, 0, 0], sizes = [8, 14, 128], strides = [1, 1, 1]} : vector<8x14x256xf32> to vector<8x14x128xf32>
    %35 = vector.extract_strided_slice %33 {offsets = [0, 0, 128], sizes = [8, 14, 128], strides = [1, 1, 1]} : vector<8x14x256xf32> to vector<8x14x128xf32>
    %c1 = arith.constant 1 : index
    %c0_19 = arith.constant 0 : index
    %36 = vector.load %arg5[%c1, %c0_19] : memref<8x128xf32, #tpu.memory_space<vmem>>, vector<1x128xf32>
    %37 = vector.shape_cast %36 : vector<1x128xf32> to vector<1x1x128xf32>
    %38 = vector.broadcast %37 : vector<1x1x128xf32> to vector<8x14x128xf32>
    %39 = arith.addf %34, %38 : vector<8x14x128xf32>
    %40 = math.tanh %39 : vector<8x14x128xf32>
    %c4 = arith.constant 4 : index
    %c0_20 = arith.constant 0 : index
    %41 = vector.load %arg5[%c4, %c0_20] : memref<8x128xf32, #tpu.memory_space<vmem>>, vector<1x128xf32>
    %42 = vector.shape_cast %41 : vector<1x128xf32> to vector<1x1x128xf32>
    %43 = vector.broadcast %42 : vector<1x1x128xf32> to vector<8x14x128xf32>
    %44 = arith.addf %35, %43 : vector<8x14x128xf32>
    %45 = vector.broadcast %4 : vector<8x1x128xf32> to vector<8x14x128xf32>
    %46 = arith.addf %44, %45 : vector<8x14x128xf32>
    %cst_21 = arith.constant 0.000000e+00 : f32
    %47 = vector.broadcast %cst_21 : f32 to vector<8x14x128xf32>
    %48 = arith.maximumf %46, %47 : vector<8x14x128xf32>
    %49 = arith.mulf %40, %48 : vector<8x14x128xf32>
    %cst_22 = arith.constant dense<0xFF800000> : vector<8x128xf32>
    %50 = vector.multi_reduction <maximumf>, %49, %cst_22 [1] : vector<8x14x128xf32> to vector<8x128xf32>
    %c128 = arith.constant 128 : index
    %c0_23 = arith.constant 0 : index
    %51 = vector.load %arg6[%c128, %c0_23] : memref<384x128xf32, #tpu.memory_space<vmem>>, vector<128x128xf32>
    %cst_24 = arith.constant dense<0.000000e+00> : vector<8x128xf32>
    %52 = tpu.matmul %50, %51, %cst_24 {dimension_numbers = #tpu.dot_dimension_numbers<[1], [0], [0], [1], [0, 0, 1, 1], [], []>} : vector<8x128xf32>, vector<128x128xf32>, vector<8x128xf32> -> vector<8x128xf32>
    %53 = arith.addf %29, %52 : vector<8x128xf32>
    %c0_25 = arith.constant 0 : index
    %c512 = arith.constant 512 : index
    %54 = vector.load %arg3[%c0_25, %c512] : memref<128x768xbf16, #tpu.memory_space<vmem>>, vector<128x256xbf16>
    %cst_26 = arith.constant dense<0.000000e+00> : vector<192x256xf32>
    %55 = tpu.matmul %0, %54, %cst_26 {dimension_numbers = #tpu.dot_dimension_numbers<[1], [0], [0], [1], [0, 0, 1, 1], [], []>} : vector<192x128xbf16>, vector<128x256xbf16>, vector<192x256xf32> -> vector<192x256xf32>
    %56 = vector.shape_cast %55 : vector<192x256xf32> to vector<8x24x256xf32>
    %57 = vector.extract_strided_slice %56 {offsets = [0, 0, 0], sizes = [8, 13, 256], strides = [1, 1, 1]} : vector<8x24x256xf32> to vector<8x13x256xf32>
    %58 = vector.extract_strided_slice %57 {offsets = [0, 0, 0], sizes = [8, 13, 128], strides = [1, 1, 1]} : vector<8x13x256xf32> to vector<8x13x128xf32>
    %59 = vector.extract_strided_slice %57 {offsets = [0, 0, 128], sizes = [8, 13, 128], strides = [1, 1, 1]} : vector<8x13x256xf32> to vector<8x13x128xf32>
    %c2 = arith.constant 2 : index
    %c0_27 = arith.constant 0 : index
    %60 = vector.load %arg5[%c2, %c0_27] : memref<8x128xf32, #tpu.memory_space<vmem>>, vector<1x128xf32>
    %61 = vector.shape_cast %60 : vector<1x128xf32> to vector<1x1x128xf32>
    %62 = vector.broadcast %61 : vector<1x1x128xf32> to vector<8x13x128xf32>
    %63 = arith.addf %58, %62 : vector<8x13x128xf32>
    %64 = math.tanh %63 : vector<8x13x128xf32>
    %c5 = arith.constant 5 : index
    %c0_28 = arith.constant 0 : index
    %65 = vector.load %arg5[%c5, %c0_28] : memref<8x128xf32, #tpu.memory_space<vmem>>, vector<1x128xf32>
    %66 = vector.shape_cast %65 : vector<1x128xf32> to vector<1x1x128xf32>
    %67 = vector.broadcast %66 : vector<1x1x128xf32> to vector<8x13x128xf32>
    %68 = arith.addf %59, %67 : vector<8x13x128xf32>
    %69 = vector.broadcast %4 : vector<8x1x128xf32> to vector<8x13x128xf32>
    %70 = arith.addf %68, %69 : vector<8x13x128xf32>
    %cst_29 = arith.constant 0.000000e+00 : f32
    %71 = vector.broadcast %cst_29 : f32 to vector<8x13x128xf32>
    %72 = arith.maximumf %70, %71 : vector<8x13x128xf32>
    %73 = arith.mulf %64, %72 : vector<8x13x128xf32>
    %cst_30 = arith.constant dense<0xFF800000> : vector<8x128xf32>
    %74 = vector.multi_reduction <maximumf>, %73, %cst_30 [1] : vector<8x13x128xf32> to vector<8x128xf32>
    %c256_31 = arith.constant 256 : index
    %c0_32 = arith.constant 0 : index
    %75 = vector.load %arg6[%c256_31, %c0_32] : memref<384x128xf32, #tpu.memory_space<vmem>>, vector<128x128xf32>
    %cst_33 = arith.constant dense<0.000000e+00> : vector<8x128xf32>
    %76 = tpu.matmul %74, %75, %cst_33 {dimension_numbers = #tpu.dot_dimension_numbers<[1], [0], [0], [1], [0, 0, 1, 1], [], []>} : vector<8x128xf32>, vector<128x128xf32>, vector<8x128xf32> -> vector<8x128xf32>
    %77 = arith.addf %53, %76 : vector<8x128xf32>
    %c6 = arith.constant 6 : index
    %c0_34 = arith.constant 0 : index
    %78 = vector.load %arg5[%c6, %c0_34] : memref<8x128xf32, #tpu.memory_space<vmem>>, vector<1x128xf32>
    %79 = vector.broadcast %78 : vector<1x128xf32> to vector<8x128xf32>
    %80 = arith.addf %77, %79 : vector<8x128xf32>
    %c0_35 = arith.constant 0 : index
    %c0_36 = arith.constant 0 : index
    %81 = vector.load %arg7[%c0_35, %c0_36] : memref<8x128xf32, #tpu.memory_space<vmem>>, vector<8x128xf32>
    tpu.vector_store %arg7[%c0_35, %c0_36], %80 {strides = array<i32>} : memref<8x128xf32, #tpu.memory_space<vmem>>, vector<8x128xf32>,
    return
  }
  func.func @transform_0(%arg0: i32) -> (i32, i32) {
    %c0_i32 = arith.constant 0 : i32
    %c0_i32_0 = arith.constant 0 : i32
    return %arg0, %c0_i32 : i32, i32
  }
  func.func @transform_1(%arg0: i32) -> (i32, i32) {
    %c0_i32 = arith.constant 0 : i32
    %c0_i32_0 = arith.constant 0 : i32
    return %arg0, %c0_i32 : i32, i32
  }
  func.func @transform_2(%arg0: i32) -> (i32, i32) {
    %c0_i32 = arith.constant 0 : i32
    %c0_i32_0 = arith.constant 0 : i32
    %c0_i32_1 = arith.constant 0 : i32
    return %c0_i32, %c0_i32_0 : i32, i32
  }
  func.func @transform_3(%arg0: i32) -> (i32, i32) {
    %c0_i32 = arith.constant 0 : i32
    %c0_i32_0 = arith.constant 0 : i32
    %c0_i32_1 = arith.constant 0 : i32
    return %c0_i32, %c0_i32_0 : i32, i32
  }
  func.func @transform_4(%arg0: i32) -> (i32, i32) {
    %c0_i32 = arith.constant 0 : i32
    %c0_i32_0 = arith.constant 0 : i32
    %c0_i32_1 = arith.constant 0 : i32
    return %c0_i32, %c0_i32_0 : i32, i32
  }
  func.func @transform_5(%arg0: i32) -> (i32, i32) {
    %c0_i32 = arith.constant 0 : i32
    %c0_i32_0 = arith.constant 0 : i32
    %c0_i32_1 = arith.constant 0 : i32
    return %c0_i32, %c0_i32_0 : i32, i32
  }
  func.func @transform_6(%arg0: i32) -> (i32, i32) {
    %c0_i32 = arith.constant 0 : i32
    %c0_i32_0 = arith.constant 0 : i32
    return %arg0, %c0_i32 : i32, i32
  }
}

</mosaic_0001>

<llo_original>
// kernel: gcae_forward.1
$region0: #{gcae_forward.1}
  #allocation0 [shape = 'u32[]', space=smem, size = 0x4, offset = 0x4, fixed_abs, tag = 'smem constant byte address 0x4 - core index']
  #allocation1 [shape = 'u32[144,128]{1,0:T(1,128)}', space=vmem, size = 0x12000, scoped, tag = 'internal scratch']
  %s0 = inlined_call_operand.vmem [shape: bf16[384,128], index: 0, kind: input, shape index: {}]
  %s1 = inlined_call_operand.vmem [shape: bf16[16,32], index: 1, kind: input, shape index: {}]
  %s2 = inlined_call_operand.vmem [shape: bf16[128,768], index: 2, kind: input, shape index: {}]
  %s3 = inlined_call_operand.vmem [shape: bf16[32,128], index: 3, kind: input, shape index: {}]
  %s4 = inlined_call_operand.vmem [shape: f32[8,128], index: 4, kind: input, shape index: {}]
  %s5 = inlined_call_operand.vmem [shape: f32[384,128], index: 5, kind: input, shape index: {}]
  %s6 = inlined_call_operand.vmem [shape: f32[16,128], index: 6, kind: output, shape index: {}]
  %s7 = sld [smem:[#allocation0]]
  $region57: #{gcae_forward.1} parent=0
    _
  %s9 = ssub.s32 1, %s7
  %s10 = scalar_select 0, %s9, %s7
  loop: start=0, step=1, limit=4
  $region2: #{gcae_forward.1} parent=0 // loop_pre_header
    _
  $region3: #{gcae_forward.1} parent=0 // loop_header
    %s12 = sphi 0, %s16
    %p13 = scmp.ge.s32.totalorder %s12, 4
    %s22 = sphi 0, %s24
    %s25 = sphi 0, %s22
    %s26 = sphi 0, %s25
    %s42 = sphi 0, %s26
    %s48 = sphi 0, %s50
    %s51 = sphi 0, %s48
    %s52 = sphi 0, %s51
    %s68 = sphi 0, %s52
    %s72 = sphi 0, %s72
    %s74 = sphi 0, %s72
    %s75 = sphi 0, %s74
    %s89 = sphi 0, %s75
    %s93 = sphi 0, %s93
    %s95 = sphi 0, %s93
    %s96 = sphi 0, %s95
    %s110 = sphi 0, %s96
    %s114 = sphi 0, %s114
    %s116 = sphi 0, %s114
    %s117 = sphi 0, %s116
    %s131 = sphi 0, %s117
    %s135 = sphi 0, %s135
    %s137 = sphi 0, %s135
    %s138 = sphi 0, %s137
    %s152 = sphi 0, %s138
    %s158 = sphi 0, %s160
    %s161 = sphi 0, %s158
    %s162 = sphi 0, %s161
    %s178 = sphi 0, %s162
  $region4: #{gcae_forward.1} parent=0 // loop_header_branch
    %15 = sbr.rel (%p13) target = $region8
  $region5: #{gcae_forward.1} parent=0 // loop_body
    %s17 = ssub.s32 %s12, 1
    %s18 = ssub.s32 %s12, 2
    %s19 = sadd.s32 %s12, 1
    %s20 = ssub.s32 %s12, %s19
    %p21 = scmp.eq.s32.totalorder %s20, 0
    %s23 = sadd.s32 %s22, 1
    %s24 = scalar_select %p21, %s22, %s23
    %p27 = pneg %p21
    %p28 = scmp.eq.s32.totalorder %s12, 1
    %p29 = por %p27, %p28
    %p30 = scmp.ne.s32.totalorder %s22, %s25
    %p31 = scmp.eq.s32.totalorder %s12, 0
    %p32 = por %p30, %p31
    %p33 = scmp.ne.s32.totalorder %s22, %s25
    %p34 = scmp.eq.s32.totalorder %s17, 1
    %p35 = por %p33, %p34
    %p36 = scmp.ne.s32.totalorder %s25, %s26
    %p37 = scmp.eq.s32.totalorder %s17, 0
    %p38 = por %p36, %p37
    %p39 = scmp.ne.s32.totalorder %s25, %s26
    %p40 = scmp.eq.s32.totalorder %s18, 1
    %p41 = por %p39, %p40
    %p43 = scmp.ne.s32.totalorder %s26, %s42
    %p44 = scmp.eq.s32.totalorder %s18, 0
    %p45 = por %p43, %p44
    %s46 = ssub.s32 %s12, %s19
    %p47 = scmp.eq.s32.totalorder %s46, 0
    %s49 = sadd.s32 %s48, 1
    %s50 = scalar_select %p47, %s48, %s49
    %p53 = pneg %p47
    %p54 = scmp.eq.s32.totalorder %s12, 1
    %p55 = por %p53, %p54
    %p56 = scmp.ne.s32.totalorder %s48, %s51
    %p57 = scmp.eq.s32.totalorder %s12, 0
    %p58 = por %p56, %p57
    %p59 = scmp.ne.s32.totalorder %s48, %s51
    %p60 = scmp.eq.s32.totalorder %s17, 1
    %p61 = por %p59, %p60
    %p62 = scmp.ne.s32.totalorder %s51, %s52
    %p63 = scmp.eq.s32.totalorder %s17, 0
    %p64 = por %p62, %p63
    %p65 = scmp.ne.s32.totalorder %s51, %s52
    %p66 = scmp.eq.s32.totalorder %s18, 1
    %p67 = por %p65, %p66
    %p69 = scmp.ne.s32.totalorder %s52, %s68
    %p70 = scmp.eq.s32.totalorder %s18, 0
    %p71 = por %p69, %p70
    %s73 = sadd.s32 %s72, 1
    %p76 = scmp.eq.s32.totalorder %s12, 1
    %p77 = scmp.ne.s32.totalorder %s72, %s74
    %p78 = scmp.eq.s32.totalorder %s12, 0
    %p79 = por %p77, %p78
    %p80 = scmp.ne.s32.totalorder %s72, %s74
    %p81 = scmp.eq.s32.totalorder %s17, 1
    %p82 = por %p80, %p81
    %p83 = scmp.ne.s32.totalorder %s74, %s75
    %p84 = scmp.eq.s32.totalorder %s17, 0
    %p85 = por %p83, %p84
    %p86 = scmp.ne.s32.totalorder %s74, %s75
    %p87 = scmp.eq.s32.totalorder %s18, 1
    %p88 = por %p86, %p87
    %p90 = scmp.ne.s32.totalorder %s75, %s89
    %p91 = scmp.eq.s32.totalorder %s18, 0
    %p92 = por %p90, %p91
    %s94 = sadd.s32 %s93, 1
    %p97 = scmp.eq.s32.totalorder %s12, 1
    %p98 = scmp.ne.s32.totalorder %s93, %s95
    %p99 = scmp.eq.s32.totalorder %s12, 0
    %p100 = por %p98, %p99
    %p101 = scmp.ne.s32.totalorder %s93, %s95
    %p102 = scmp.eq.s32.totalorder %s17, 1
    %p103 = por %p101, %p102
    %p104 = scmp.ne.s32.totalorder %s95, %s96
    %p105 = scmp.eq.s32.totalorder %s17, 0
    %p106 = por %p104, %p105
    %p107 = scmp.ne.s32.totalorder %s95, %s96
    %p108 = scmp.eq.s32.totalorder %s18, 1
    %p109 = por %p107, %p108
    %p111 = scmp.ne.s32.totalorder %s96, %s110
    %p112 = scmp.eq.s32.totalorder %s18, 0
    %p113 = por %p111, %p112
    %s115 = sadd.s32 %s114, 1
    %p118 = scmp.eq.s32.totalorder %s12, 1
    %p119 = scmp.ne.s32.totalorder %s114, %s116
    %p120 = scmp.eq.s32.totalorder %s12, 0
    %p121 = por %p119, %p120
    %p122 = scmp.ne.s32.totalorder %s114, %s116
    %p123 = scmp.eq.s32.totalorder %s17, 1
    %p124 = por %p122, %p123
    %p125 = scmp.ne.s32.totalorder %s116, %s117
    %p126 = scmp.eq.s32.totalorder %s17, 0
    %p127 = por %p125, %p126
    %p128 = scmp.ne.s32.totalorder %s116, %s117
    %p129 = scmp.eq.s32.totalorder %s18, 1
    %p130 = por %p128, %p129
    %p132 = scmp.ne.s32.totalorder %s117, %s131
    %p133 = scmp.eq.s32.totalorder %s18, 0
    %p134 = por %p132, %p133
    %s136 = sadd.s32 %s135, 1
    %p139 = scmp.eq.s32.totalorder %s12, 1
    %p140 = scmp.ne.s32.totalorder %s135, %s137
    %p141 = scmp.eq.s32.totalorder %s12, 0
    %p142 = por %p140, %p141
    %p143 = scmp.ne.s32.totalorder %s135, %s137
    %p144 = scmp.eq.s32.totalorder %s17, 1
    %p145 = por %p143, %p144
    %p146 = scmp.ne.s32.totalorder %s137, %s138
    %p147 = scmp.eq.s32.totalorder %s17, 0
    %p148 = por %p146, %p147
    %p149 = scmp.ne.s32.totalorder %s137, %s138
    %p150 = scmp.eq.s32.totalorder %s18, 1
    %p151 = por %p149, %p150
    %p153 = scmp.ne.s32.totalorder %s138, %s152
    %p154 = scmp.eq.s32.totalorder %s18, 0
    %p155 = por %p153, %p154
    %s156 = ssub.s32 %s12, %s19
    %p157 = scmp.eq.s32.totalorder %s156, 0
    %s159 = sadd.s32 %s158, 1
    %s160 = scalar_select %p157, %s158, %s159
    %p163 = pneg %p157
    %p164 = scmp.eq.s32.totalorder %s12, 1
    %p165 = por %p163, %p164
    %p166 = scmp.ne.s32.totalorder %s158, %s161
    %p167 = scmp.eq.s32.totalorder %s12, 0
    %p168 = por %p166, %p167
    %p169 = scmp.ne.s32.totalorder %s158, %s161
    %p170 = scmp.eq.s32.totalorder %s17, 1
    %p171 = por %p169, %p170
    %p172 = scmp.ne.s32.totalorder %s161, %s162
    %p173 = scmp.eq.s32.totalorder %s17, 0
    %p174 = por %p172, %p173
    %p175 = scmp.ne.s32.totalorder %s161, %s162
    %p176 = scmp.eq.s32.totalorder %s18, 1
    %p177 = por %p175, %p176
    %p179 = scmp.ne.s32.totalorder %s162, %s178
    %p180 = scmp.eq.s32.totalorder %s18, 0
    %p181 = por %p179, %p180
    %p182 = scmp.le.s32.totalorder 1, %s12
    %p183 = scmp.lt.s32.totalorder %s12, 3
    %p184 = pnand %p182, %p183
    %p185 = pneg %p184
    // Predicated region
    $region9: #{gcae_forward.1} parent=5 // pred_check
      _
    $region10: #{gcae_forward.1} parent=5 // pred_check_branch
      %187 = sbr.rel (%p184) target = $region12
    $region11: #{gcae_forward.1} parent=5 // pred_region
      %s188 = ssub.s32 %s12, 1
      // Predicated region
      $region13: #{gcae_forward.1} parent=11 // pred_check
        %p189 = pneg %p85
      $region14: #{gcae_forward.1} parent=11 // pred_check_branch
        %191 = sbr.rel (%p189) target = $region16
      $region15: #{gcae_forward.1} parent=11 // pred_region
        _
      $region16: #{gcae_forward.1} parent=11 // pred_fallthru
        _
      // Predicated region
      $region17: #{gcae_forward.1} parent=11 // pred_check
        %p192 = pneg %p106
      $region18: #{gcae_forward.1} parent=11 // pred_check_branch
        %194 = sbr.rel (%p192) target = $region20
      $region19: #{gcae_forward.1} parent=11 // pred_region
        _
      $region20: #{gcae_forward.1} parent=11 // pred_fallthru
        _
      // Predicated region
      $region21: #{gcae_forward.1} parent=11 // pred_check
        %p195 = pneg %p127
      $region22: #{gcae_forward.1} parent=11 // pred_check_branch
        %197 = sbr.rel (%p195) target = $region24
      $region23: #{gcae_forward.1} parent=11 // pred_region
        _
      $region24: #{gcae_forward.1} parent=11 // pred_fallthru
        _
      // Predicated region
      $region25: #{gcae_forward.1} parent=11 // pred_check
        %p198 = pneg %p148
      $region26: #{gcae_forward.1} parent=11 // pred_check_branch
        %200 = sbr.rel (%p198) target = $region28
      $region27: #{gcae_forward.1} parent=11 // pred_region
        _
      $region28: #{gcae_forward.1} parent=11 // pred_fallthru
        _
    $region12: #{gcae_forward.1} parent=5 // pred_fallthru
      _
    %p201 = scmp.lt.s32.totalorder %s12, 2
    // Predicated region
    $region29: #{gcae_forward.1} parent=5 // pred_check
      %p202 = pneg %p201
    $region30: #{gcae_forward.1} parent=5 // pred_check_branch
      %204 = sbr.rel (%p202) target = $region32
    $region31: #{gcae_forward.1} parent=5 // pred_region
      // Predicated region
      $region33: #{gcae_forward.1} parent=31 // pred_check
        %p205 = pneg %p32
      $region34: #{gcae_forward.1} parent=31 // pred_check_branch
        %207 = sbr.rel (%p205) target = $region36
      $region35: #{gcae_forward.1} parent=31 // pred_region
        %s208 = smul.u32 24, %s12
        %p209 = scmp.lt.s32.totalorder %s208, 47
        %s210 = scalar_select %p209, %s208, 47
        %s211 = smul.addr %s210, 4
        %s212 = scalar_lea.vmem %s0, %s211
        %s213 = smul.u32 24, %s12
      $region36: #{gcae_forward.1} parent=31 // pred_fallthru
        _
      // Predicated region
      $region37: #{gcae_forward.1} parent=31 // pred_check
        %p214 = pneg %p58
      $region38: #{gcae_forward.1} parent=31 // pred_check_branch
        %216 = sbr.rel (%p214) target = $region40
      $region39: #{gcae_forward.1} parent=31 // pred_region
        %p217 = scmp.lt.s32.totalorder %s12, 1
        %s218 = scalar_select %p217, %s12, 1
        %s219 = smul.addr %s218, 4
        %s220 = scalar_lea.vmem %s1, %s219
      $region40: #{gcae_forward.1} parent=31 // pred_fallthru
        _
    $region32: #{gcae_forward.1} parent=5 // pred_fallthru
      _
    %p221 = scmp.le.s32.totalorder 1, %s12
    %p222 = scmp.lt.s32.totalorder %s12, 3
    %p223 = pnand %p221, %p222
    %p224 = pneg %p223
    // Predicated region
    $region41: #{gcae_forward.1} parent=5 // pred_check
      _
    $region42: #{gcae_forward.1} parent=5 // pred_check_branch
      %226 = sbr.rel (%p223) target = $region44
    $region43: #{gcae_forward.1} parent=5 // pred_region
      %s227 = ssub.s32 %s12, 1
      %s228 = smul.u32 24, %s17
      %p229 = scmp.lt.s32.totalorder %s228, 47
      %s230 = scalar_select %p229, %s228, 47
      %s231 = smul.addr %s230, 4
      %s232 = scalar_lea.vmem %s0, %s231
      %p233 = pneg %p38
      %p234 = pneg %p35
      %p235 = scmp.lt.s32.totalorder %s17, 1
      %s236 = scalar_select %p235, %s17, 1
      %s237 = smul.addr %s236, 4
      %s238 = scalar_lea.vmem %s1, %s237
      %p239 = pneg %p64
      %p240 = pneg %p61
      %p241 = pneg %p85
      %p242 = pneg %p82
      %p243 = pneg %p106
      %p244 = pneg %p103
      %p245 = pneg %p127
      %p246 = pneg %p124
      %p247 = pneg %p148
      %p248 = pneg %p145
      %p249 = pneg %p174
      %p250 = pneg %p171
      %p251 = scmp.lt.s32.totalorder %s17, 1
      %s252 = scalar_select %p251, %s17, 1
      %s253 = smul.addr %s252, 8
      %s254 = scalar_lea.vmem %s6, %s253
      %s255 = smul.u32 24, %s17
      %p256 = scmp.lt.s32.totalorder %s255, 47
      %s257 = scalar_select %p256, %s255, 47
      %s258 = smul.addr %s257, 4
      %s259 = scalar_lea.vmem %s0, %s258
      %s260 = smul.u32 24, %s17
      %p261 = scmp.lt.s32.totalorder %s17, 1
      %s262 = scalar_select %p261, %s17, 1
      %s263 = smul.addr %s262, 4
      %s264 = scalar_lea.vmem %s1, %s263
      %p265 = scmp.lt.s32.totalorder %s17, 1
      %s266 = scalar_select %p265, %s17, 1
      %s267 = smul.addr %s266, 8
      %s268 = scalar_lea.vmem %s6, %s267
      %v270 = vld [vmem:[%s259] sm:$0xf]
      %v271 = vld [vmem:[%s259 + $0x4] sm:$0xf]
      %v272 = vld [vmem:[%s259 + $0x8] sm:$0xf]
      %v273 = vld [vmem:[%s259 + $0xc] sm:$0xf]
      %v274 = vld [vmem:[%s259 + $0x10] sm:$0xf]
      %v275 = vld [vmem:[%s259 + $0x14] sm:$0xf]
      %v276 = vld [vmem:[%s259 + $0x18] sm:$0xf]
      %v277 = vld [vmem:[%s259 + $0x1c] sm:$0xf]
      %v278 = vld [vmem:[%s259 + $0x20] sm:$0xf]
      %v279 = vld [vmem:[%s259 + $0x24] sm:$0xf]
      %v280 = vld [vmem:[%s259 + $0x28] sm:$0xf]
      %v281 = vld [vmem:[%s259 + $0x2c] sm:$0xf]
      %v282 = vld [vmem:[%s259 + $0x30] sm:$0xf]
      %v283 = vld [vmem:[%s259 + $0x34] sm:$0xf]
      %v284 = vld [vmem:[%s259 + $0x38] sm:$0xf]
      %v285 = vld [vmem:[%s259 + $0x3c] sm:$0xf]
      %v286 = vld [vmem:[%s259 + $0x40] sm:$0xf]
      %v287 = vld [vmem:[%s259 + $0x44] sm:$0xf]
      %v288 = vld [vmem:[%s259 + $0x48] sm:$0xf]
      %v289 = vld [vmem:[%s259 + $0x4c] sm:$0xf]
      %v290 = vld [vmem:[%s259 + $0x50] sm:$0xf]
      %v291 = vld [vmem:[%s259 + $0x54] sm:$0xf]
      %v292 = vld [vmem:[%s259 + $0x58] sm:$0xf]
      %v293 = vld [vmem:[%s259 + $0x5c] sm:$0xf]
      %v294 = vld [vmem:[%s264] sm:$0xf]
      %v295 = vld [vmem:[%s3] sm:$0xf]
      %v296 = vld [vmem:[%s3 + $0x4] sm:$0xf]
      %v297 = vld [vmem:[%s3 + $0x8] sm:$0xf]
      %v298 = vld [vmem:[%s3 + $0xc] sm:$0xf]
      %v303 = vunpack.c.l.b16 %v295
      %v304 = vunpack.c.l.b16 %v296
      %v305 = vunpack.c.l.b16 %v297
      %v306 = vunpack.c.l.b16 %v298
      %v307 = vpack.c.b16 %v304, %v303
      %v308 = vpack.c.b16 %v306, %v305
      %vm311 = vcmask 261120
      %v313 = vsel %vm311, %v294, 0
      %315 = vmatprep.subr.bf16.mxu0 0
      %316 = vmatpush1.bf16.msra.mxu0 0
      %317 = vmatprep.subr.bf16.mxu0 0
      %318 = vmatpush1.bf16.msra.mxu0 0
      %319 = vmatprep.subr.bf16.mxu0 0
      %320 = vmatpush1.bf16.msra.mxu0 0
      %321 = vmatprep.subr.bf16.mxu0 0
      %322 = vmatpush1.bf16.msra.mxu0 0
      %323 = vmatprep.subr.bf16.mxu0 0
      %324 = vmatpush1.bf16.msra.mxu0 0
      %325 = vmatprep.subr.bf16.mxu0 0
      %326 = vmatpush1.bf16.msra.mxu0 0
      %327 = vmatprep.subr.bf16.mxu0 0
      %328 = vmatpush1.bf16.msra.mxu0 %v308
      %329 = vmatprep.subr.bf16.mxu0 0
      %330 = vmatpush1.bf16.msra.mxu0 %v307
      %331 = vmatprep.subr.bf16.mxu0 0
      %332 = vmatpush2.bf16.msra.mxu0 0
      %333 = vmatprep.subr.bf16.mxu0 0
      %334 = vmatpush2.bf16.msra.mxu0 0
      %335 = vmatprep.subr.bf16.mxu0 0
      %336 = vmatpush2.bf16.msra.mxu0 0
      %337 = vmatprep.subr.bf16.mxu0 0
      %338 = vmatpush2.bf16.msra.mxu0 0
      %339 = vmatprep.subr.bf16.mxu0 0
      %340 = vmatpush2.bf16.msra.mxu0 0
      %341 = vmatprep.subr.bf16.mxu0 0
      %342 = vmatpush2.bf16.msra.mxu0 0
      %343 = vmatprep.subr.bf16.mxu0 0
      %344 = vmatpush2.bf16.msra.mxu0 0
      %345 = vmatprep.subr.bf16.mxu0 0
      %346 = vmatpush2.bf16.msra.mxu0 0
      %347 = vmatprep.mubr.bf16.mxu0 0
      %348 = vmatmul.mubr.bf16.gmra.mxu0 %v313
      %v349 = vpop.f32.mrf.mxu0
      %v350 = vadd.f32 0.0, %v349
      %v351 = vpop.f32.mrf.mxu0
      %v352 = vpop.f32.mrf.mxu0
      %v353 = vpop.f32.mrf.mxu0
      %354 = vdwg.mxu0
      %v356 = vcombine.high %v350, %v350
      %v358 = vunpack.c.l.s4 1966171168
      %v359 = vunpack.c.0.s8 %v358
      %v360 = vlaneseq
      %v361 = vshrl.u32 %v360, 7
      %v362 = vsub.s32 %v359, %v361
      %v363 = vrot.slane %v350, %v362
      %v365 = vunpack.c.l.s4 1966171168
      %v366 = vunpack.c.0.s8 %v365
      %v367 = vlaneseq
      %v368 = vshrl.u32 %v367, 7
      %v369 = vsub.s32 %v366, %v368
      %v370 = vrot.slane %v356, %v369
      %v371 = vcombine.high %v363, %v363
      %v372 = vcombine.high %v370, %v370
      %v374 = vunpack.c.l.s4 1966171168
      %v375 = vunpack.c.0.s8 %v374
      %v376 = vlaneseq
      %v377 = vshrl.u32 %v376, 7
      %v378 = vsub.s32 %v375, %v377
      %v379 = vrot.slane %v363, %v378
      %v381 = vunpack.c.l.s4 1966171168
      %v382 = vunpack.c.0.s8 %v381
      %v383 = vlaneseq
      %v384 = vshrl.u32 %v383, 7
      %v385 = vsub.s32 %v382, %v384
      %v386 = vrot.slane %v370, %v385
      %v388 = vunpack.c.l.s4 1966171168
      %v389 = vunpack.c.0.s8 %v388
      %v390 = vlaneseq
      %v391 = vshrl.u32 %v390, 7
      %v392 = vsub.s32 %v389, %v391
      %v393 = vrot.slane %v371, %v392
      %v395 = vunpack.c.l.s4 1966171168
      %v396 = vunpack.c.0.s8 %v395
      %v397 = vlaneseq
      %v398 = vshrl.u32 %v397, 7
      %v399 = vsub.s32 %v396, %v398
      %v400 = vrot.slane %v372, %v399
      %v401 = vcombine.high %v379, %v379
      %v402 = vcombine.high %v386, %v386
      %v403 = vcombine.high %v393, %v393
      %v404 = vcombine.high %v400, %v400
      %v405 = vld [vmem:[%s2] sm:$0xff]
      %v406 = vld [vmem:[%s2 + $0x18] sm:$0xff]
      %v407 = vld [vmem:[%s2 + $0x30] sm:$0xff]
      %v408 = vld [vmem:[%s2 + $0x48] sm:$0xff]
      %v409 = vld [vmem:[%s2 + $0x60] sm:$0xff]
      %v410 = vld [vmem:[%s2 + $0x78] sm:$0xff]
      %v411 = vld [vmem:[%s2 + $0x90] sm:$0xff]
      %v412 = vld [vmem:[%s2 + $0xa8] sm:$0xff]
      %v413 = vld [vmem:[%s2 + $0xc0] sm:$0xff]
      %v414 = vld [vmem:[%s2 + $0xd8] sm:$0xff]
      %v415 = vld [vmem:[%s2 + $0xf0] sm:$0xff]
      %v416 = vld [vmem:[%s2 + $0x108] sm:$0xff]
      %v417 = vld [vmem:[%s2 + $0x120] sm:$0xff]
      %v418 = vld [vmem:[%s2 + $0x138] sm:$0xff]
      %v419 = vld [vmem:[%s2 + $0x150] sm:$0xff]
      %v420 = vld [vmem:[%s2 + $0x168] sm:$0xff]
      %v445 = vunpack.c.l.b16 %v270
      %v446 = vunpack.c.l.b16 %v271
      %v447 = vunpack.c.l.b16 %v272
      %v448 = vunpack.c.l.b16 %v273
      %v449 = vunpack.c.l.b16 %v274
      %v450 = vunpack.c.l.b16 %v275
      %v451 = vunpack.c.l.b16 %v276
      %v452 = vunpack.c.l.b16 %v277
      %v453 = vunpack.c.l.b16 %v278
      %v454 = vunpack.c.l.b16 %v279
      %v455 = vunpack.c.l.b16 %v280
      %v456 = vunpack.c.l.b16 %v281
      %v457 = vunpack.c.l.b16 %v282
      %v458 = vunpack.c.l.b16 %v283
      %v459 = vunpack.c.l.b16 %v284
      %v460 = vunpack.c.l.b16 %v285
      %v461 = vunpack.c.l.b16 %v286
      %v462 = vunpack.c.l.b16 %v287
      %v463 = vunpack.c.l.b16 %v288
      %v464 = vunpack.c.l.b16 %v289
      %v465 = vunpack.c.l.b16 %v290
      %v466 = vunpack.c.l.b16 %v291
      %v467 = vunpack.c.l.b16 %v292
      %v468 = vunpack.c.l.b16 %v293
      %v469 = vpack.c.b16 %v446, %v445
      %v470 = vpack.c.b16 %v448, %v447
      %v471 = vpack.c.b16 %v450, %v449
      %v472 = vpack.c.b16 %v452, %v451
      %v473 = vpack.c.b16 %v454, %v453
      %v474 = vpack.c.b16 %v456, %v455
      %v475 = vpack.c.b16 %v458, %v457
      %v476 = vpack.c.b16 %v460, %v459
      %v477 = vpack.c.b16 %v462, %v461
      %v478 = vpack.c.b16 %v464, %v463
      %v479 = vpack.c.b16 %v466, %v465
      %v480 = vpack.c.b16 %v468, %v467
      %v509 = vunpack.c.l.b16 %v405
      %v510 = vunpack.c.h.b16 %v405
      %v511 = vunpack.c.l.b16 %v406
      %v512 = vunpack.c.h.b16 %v406
      %v513 = vunpack.c.l.b16 %v407
      %v514 = vunpack.c.h.b16 %v407
      %v515 = vunpack.c.l.b16 %v408
      %v516 = vunpack.c.h.b16 %v408
      %v517 = vunpack.c.l.b16 %v409
      %v518 = vunpack.c.h.b16 %v409
      %v519 = vunpack.c.l.b16 %v410
      %v520 = vunpack.c.h.b16 %v410
      %v521 = vunpack.c.l.b16 %v411
      %v522 = vunpack.c.h.b16 %v411
      %v523 = vunpack.c.l.b16 %v412
      %v524 = vunpack.c.h.b16 %v412
      %v525 = vunpack.c.l.b16 %v413
      %v526 = vunpack.c.h.b16 %v413
      %v527 = vunpack.c.l.b16 %v414
      %v528 = vunpack.c.h.b16 %v414
      %v529 = vunpack.c.l.b16 %v415
      %v530 = vunpack.c.h.b16 %v415
      %v531 = vunpack.c.l.b16 %v416
      %v532 = vunpack.c.h.b16 %v416
      %v533 = vunpack.c.l.b16 %v417
      %v534 = vunpack.c.h.b16 %v417
      %v535 = vunpack.c.l.b16 %v418
      %v536 = vunpack.c.h.b16 %v418
      %v537 = vunpack.c.l.b16 %v419
      %v538 = vunpack.c.h.b16 %v419
      %v539 = vunpack.c.l.b16 %v420
      %v540 = vunpack.c.h.b16 %v420
      %v541 = vpack.c.b16 %v511, %v509
      %v542 = vpack.c.b16 %v512, %v510
      %v543 = vpack.c.b16 %v515, %v513
      %v544 = vpack.c.b16 %v516, %v514
      %v545 = vpack.c.b16 %v519, %v517
      %v546 = vpack.c.b16 %v520, %v518
      %v547 = vpack.c.b16 %v523, %v521
      %v548 = vpack.c.b16 %v524, %v522
      %v549 = vpack.c.b16 %v527, %v525
      %v550 = vpack.c.b16 %v528, %v526
      %v551 = vpack.c.b16 %v531, %v529
      %v552 = vpack.c.b16 %v532, %v530
      %v553 = vpack.c.b16 %v535, %v533
      %v554 = vpack.c.b16 %v536, %v534
      %v555 = vpack.c.b16 %v539, %v537
      %v556 = vpack.c.b16 %v540, %v538
      %573 = vmatprep.subr.bf16.mxu0 %v556
      %574 = vmatpush1.bf16.msra.mxu0 %v555
      %575 = vmatprep.subr.bf16.mxu0 %v554
      %576 = vmatpush1.bf16.msra.mxu0 %v553
      %577 = vmatprep.subr.bf16.mxu0 %v552
      %578 = vmatpush1.bf16.msra.mxu0 %v551
      %579 = vmatprep.subr.bf16.mxu0 %v550
      %580 = vmatpush1.bf16.msra.mxu0 %v549
      %581 = vmatprep.subr.bf16.mxu0 %v548
      %582 = vmatpush1.bf16.msra.mxu0 %v547
      %583 = vmatprep.subr.bf16.mxu0 %v546
      %584 = vmatpush1.bf16.msra.mxu0 %v545
      %585 = vmatprep.subr.bf16.mxu0 %v544
      %586 = vmatpush1.bf16.msra.mxu0 %v543
      %587 = vmatprep.subr.bf16.mxu0 %v542
      %588 = vmatpush1.bf16.msra.mxu0 %v541
      %589 = vmatprep.subr.bf16.mxu0 0
      %590 = vmatpush2.bf16.msra.mxu0 0
      %591 = vmatprep.subr.bf16.mxu0 0
      %592 = vmatpush2.bf16.msra.mxu0 0
      %593 = vmatprep.subr.bf16.mxu0 0
      %594 = vmatpush2.bf16.msra.mxu0 0
      %595 = vmatprep.subr.bf16.mxu0 0
      %596 = vmatpush2.bf16.msra.mxu0 0
      %597 = vmatprep.subr.bf16.mxu0 0
      %598 = vmatpush2.bf16.msra.mxu0 0
      %599 = vmatprep.subr.bf16.mxu0 0
      %600 = vmatpush2.bf16.msra.mxu0 0
      %601 = vmatprep.subr.bf16.mxu0 0
      %602 = vmatpush2.bf16.msra.mxu0 0
      %603 = vmatprep.subr.bf16.mxu0 0
      %604 = vmatpush2.bf16.msra.mxu0 0
      %605 = vmatprep.mubr.bf16.mxu0 0
      %606 = vmatmul.mubr.bf16.gmra.mxu0 %v469
      %v607 = vpop.f32.mrf.mxu0
      %v608 = vadd.f32 0.0, %v607
      %v609 = vpop.f32.mrf.mxu0
      %v610 = vadd.f32 0.0, %v609
      %v611 = vpop.f32.mrf.mxu0
      %v612 = vadd.f32 0.0, %v611
      %v613 = vpop.f32.mrf.mxu0
      %v614 = vadd.f32 0.0, %v613
      %615 = vmatprep.mubr.bf16.mxu0 0
      %616 = vmatmul.mubr.bf16.gmra.mxu0 %v470
      %v617 = vpop.f32.mrf.mxu0
      %v618 = vpop.f32.mrf.mxu0
      %v619 = vpop.f32.mrf.mxu0
      %v620 = vadd.f32 0.0, %v619
      %v621 = vpop.f32.mrf.mxu0
      %v622 = vadd.f32 0.0, %v621
      %623 = vmatprep.mubr.bf16.mxu0 0
      %624 = vmatmul.mubr.bf16.gmra.mxu0 %v471
      %v625 = vpop.f32.mrf.mxu0
      %v626 = vadd.f32 0.0, %v625
      %v627 = vpop.f32.mrf.mxu0
      %v628 = vadd.f32 0.0, %v627
      %v629 = vpop.f32.mrf.mxu0
      %v630 = vpop.f32.mrf.mxu0
      %631 = vmatprep.mubr.bf16.mxu0 0
      %632 = vmatmul.mubr.bf16.gmra.mxu0 %v472
      %v633 = vpop.f32.mrf.mxu0
      %v634 = vadd.f32 0.0, %v633
      %v635 = vpop.f32.mrf.mxu0
      %v636 = vadd.f32 0.0, %v635
      %v637 = vpop.f32.mrf.mxu0
      %v638 = vadd.f32 0.0, %v637
      %v639 = vpop.f32.mrf.mxu0
      %v640 = vadd.f32 0.0, %v639
      %641 = vmatprep.mubr.bf16.mxu0 0
      %642 = vmatmul.mubr.bf16.gmra.mxu0 %v473
      %v643 = vpop.f32.mrf.mxu0
      %v644 = vpop.f32.mrf.mxu0
      %v645 = vpop.f32.mrf.mxu0
      %v646 = vadd.f32 0.0, %v645
      %v647 = vpop.f32.mrf.mxu0
      %v648 = vadd.f32 0.0, %v647
      %649 = vmatprep.mubr.bf16.mxu0 0
      %650 = vmatmul.mubr.bf16.gmra.mxu0 %v474
      %v651 = vpop.f32.mrf.mxu0
      %v652 = vadd.f32 0.0, %v651
      %v653 = vpop.f32.mrf.mxu0
      %v654 = vadd.f32 0.0, %v653
      %v655 = vpop.f32.mrf.mxu0
      %v656 = vpop.f32.mrf.mxu0
      %657 = vmatprep.mubr.bf16.mxu0 0
      %658 = vmatmul.mubr.bf16.gmra.mxu0 %v475
      %v659 = vpop.f32.mrf.mxu0
      %v660 = vadd.f32 0.0, %v659
      %v661 = vpop.f32.mrf.mxu0
      %v662 = vadd.f32 0.0, %v661
      %v663 = vpop.f32.mrf.mxu0
      %v664 = vadd.f32 0.0, %v663
      %v665 = vpop.f32.mrf.mxu0
      %v666 = vadd.f32 0.0, %v665
      %667 = vmatprep.mubr.bf16.mxu0 0
      %668 = vmatmul.mubr.bf16.gmra.mxu0 %v476
      %v669 = vpop.f32.mrf.mxu0
      %v670 = vpop.f32.mrf.mxu0
      %v671 = vpop.f32.mrf.mxu0
      %v672 = vadd.f32 0.0, %v671
      %v673 = vpop.f32.mrf.mxu0
      %v674 = vadd.f32 0.0, %v673
      %675 = vmatprep.mubr.bf16.mxu0 0
      %676 = vmatmul.mubr.bf16.gmra.mxu0 %v477
      %v677 = vpop.f32.mrf.mxu0
      %v678 = vadd.f32 0.0, %v677
      %v679 = vpop.f32.mrf.mxu0
      %v680 = vadd.f32 0.0, %v679
      %v681 = vpop.f32.mrf.mxu0
      %v682 = vpop.f32.mrf.mxu0
      %683 = vmatprep.mubr.bf16.mxu0 0
      %684 = vmatmul.mubr.bf16.gmra.mxu0 %v478
      %v685 = vpop.f32.mrf.mxu0
      %v686 = vadd.f32 0.0, %v685
      %v687 = vpop.f32.mrf.mxu0
      %v688 = vadd.f32 0.0, %v687
      %v689 = vpop.f32.mrf.mxu0
      %v690 = vadd.f32 0.0, %v689
      %v691 = vpop.f32.mrf.mxu0
      %v692 = vadd.f32 0.0, %v691
      %693 = vmatprep.mubr.bf16.mxu0 0
      %694 = vmatmul.mubr.bf16.gmra.mxu0 %v479
      %v695 = vpop.f32.mrf.mxu0
      %v696 = vpop.f32.mrf.mxu0
      %v697 = vpop.f32.mrf.mxu0
      %v698 = vadd.f32 0.0, %v697
      %v699 = vpop.f32.mrf.mxu0
      %v700 = vadd.f32 0.0, %v699
      %701 = vmatprep.mubr.bf16.mxu0 0
      %702 = vmatmul.mubr.bf16.gmra.mxu0 %v480
      %v703 = vpop.f32.mrf.mxu0
      %v704 = vadd.f32 0.0, %v703
      %v705 = vpop.f32.mrf.mxu0
      %v706 = vadd.f32 0.0, %v705
      %v707 = vpop.f32.mrf.mxu0
      %v708 = vpop.f32.mrf.mxu0
      %709 = vdwg.mxu0
      %v710 = vld [vmem:[%s4] sm:$0x1]
      %v711 = vlaneseq
      %v712 = vshrl.u32 %v711, 7
      %v713 = vsub.s32 0, %v712
      %v714 = vrot.slane %v710, %v713
      %v715 = vadd.f32 %v608, %v714
      %v716 = vadd.f32 %v612, %v714
      %v717 = vadd.f32 %v620, %v714
      %v718 = vadd.f32 %v626, %v714
      %v719 = vadd.f32 %v634, %v714
      %v720 = vadd.f32 %v638, %v714
      %v721 = vadd.f32 %v646, %v714
      %v722 = vadd.f32 %v652, %v714
      %v723 = vadd.f32 %v660, %v714
      %v724 = vadd.f32 %v664, %v714
      %v725 = vadd.f32 %v672, %v714
      %v726 = vadd.f32 %v678, %v714
      %v727 = vadd.f32 %v686, %v714
      %v728 = vadd.f32 %v690, %v714
      %v729 = vadd.f32 %v698, %v714
      %v730 = vadd.f32 %v704, %v714
      %v731 = vtanh.pop %v715
      %v732 = vtanh.pop %v716
      %v733 = vtanh.pop %v717
      %v734 = vtanh.pop %v718
      %v735 = vtanh.pop %v719
      %v736 = vtanh.pop %v720
      %v737 = vtanh.pop %v721
      %v738 = vtanh.pop %v722
      %v739 = vtanh.pop %v723
      %v740 = vtanh.pop %v724
      %v741 = vtanh.pop %v725
      %v742 = vtanh.pop %v726
      %v743 = vtanh.pop %v727
      %v744 = vtanh.pop %v728
      %v745 = vtanh.pop %v729
      %v746 = vtanh.pop %v730
      %v747 = vld [vmem:[%s4 + $0x3] sm:$0x1]
      %v748 = vlaneseq
      %v749 = vshrl.u32 %v748, 7
      %v750 = vsub.s32 0, %v749
      %v751 = vrot.slane %v747, %v750
      %v752 = vadd.f32 %v610, %v751
      %v753 = vadd.f32 %v614, %v751
      %v754 = vadd.f32 %v622, %v751
      %v755 = vadd.f32 %v628, %v751
      %v756 = vadd.f32 %v636, %v751
      %v757 = vadd.f32 %v640, %v751
      %v758 = vadd.f32 %v648, %v751
      %v759 = vadd.f32 %v654, %v751
      %v760 = vadd.f32 %v662, %v751
      %v761 = vadd.f32 %v666, %v751
      %v762 = vadd.f32 %v674, %v751
      %v763 = vadd.f32 %v680, %v751
      %v764 = vadd.f32 %v688, %v751
      %v765 = vadd.f32 %v692, %v751
      %v766 = vadd.f32 %v700, %v751
      %v767 = vadd.f32 %v706, %v751
      %v768 = vlaneseq
      %v769 = vshrl.u32 %v768, 7
      %v770 = vsub.s32 0, %v769
      %v771 = vrot.slane %v379, %v770
      %v772 = vlaneseq
      %v773 = vshrl.u32 %v772, 7
      %v774 = vsub.s32 0, %v773
      %v775 = vrot.slane %v393, %v774
      %v776 = vlaneseq
      %v777 = vshrl.u32 %v776, 7
      %v778 = vsub.s32 0, %v777
      %v779 = vrot.slane %v401, %v778
      %v780 = vlaneseq
      %v781 = vshrl.u32 %v780, 7
      %v782 = vsub.s32 0, %v781
      %v783 = vrot.slane %v403, %v782
      %v784 = vlaneseq
      %v785 = vshrl.u32 %v784, 7
      %v786 = vsub.s32 0, %v785
      %v787 = vrot.slane %v386, %v786
      %v788 = vlaneseq
      %v789 = vshrl.u32 %v788, 7
      %v790 = vsub.s32 0, %v789
      %v791 = vrot.slane %v400, %v790
      %v792 = vlaneseq
      %v793 = vshrl.u32 %v792, 7
      %v794 = vsub.s32 0, %v793
      %v795 = vrot.slane %v402, %v794
      %v796 = vlaneseq
      %v797 = vshrl.u32 %v796, 7
      %v798 = vsub.s32 0, %v797
      %v799 = vrot.slane %v404, %v798
      %v808 = vadd.f32 %v752, %v771
      %v809 = vadd.f32 %v753, %v771
      %v810 = vadd.f32 %v754, %v775
      %v811 = vadd.f32 %v755, %v775
      %v812 = vadd.f32 %v756, %v779
      %v813 = vadd.f32 %v757, %v779
      %v814 = vadd.f32 %v758, %v783
      %v815 = vadd.f32 %v759, %v783
      %v816 = vadd.f32 %v760, %v787
      %v817 = vadd.f32 %v761, %v787
      %v818 = vadd.f32 %v762, %v791
      %v819 = vadd.f32 %v763, %v791
      %v820 = vadd.f32 %v764, %v795
      %v821 = vadd.f32 %v765, %v795
      %v822 = vadd.f32 %v766, %v799
      %v823 = vadd.f32 %v767, %v799
      %v824 = vmax.f32 %v808, 0.0
      %v825 = vmax.f32 %v809, 0.0
      %v826 = vmax.f32 %v810, 0.0
      %v827 = vmax.f32 %v811, 0.0
      %v828 = vmax.f32 %v812, 0.0
      %v829 = vmax.f32 %v813, 0.0
      %v830 = vmax.f32 %v814, 0.0
      %v831 = vmax.f32 %v815, 0.0
      %v832 = vmax.f32 %v816, 0.0
      %v833 = vmax.f32 %v817, 0.0
      %v834 = vmax.f32 %v818, 0.0
      %v835 = vmax.f32 %v819, 0.0
      %v836 = vmax.f32 %v820, 0.0
      %v837 = vmax.f32 %v821, 0.0
      %v838 = vmax.f32 %v822, 0.0
      %v839 = vmax.f32 %v823, 0.0
      %v840 = vmul.f32 %v731, %v824
      %v841 = vmul.f32 %v732, %v825
      %v842 = vmul.f32 %v733, %v826
      %v843 = vmul.f32 %v734, %v827
      %v844 = vmul.f32 %v735, %v828
      %v845 = vmul.f32 %v736, %v829
      %v846 = vmul.f32 %v737, %v830
      %v847 = vmul.f32 %v738, %v831
      %v848 = vmul.f32 %v739, %v832
      %v849 = vmul.f32 %v740, %v833
      %v850 = vmul.f32 %v741, %v834
      %v851 = vmul.f32 %v742, %v835
      %v852 = vmul.f32 %v743, %v836
      %v853 = vmul.f32 %v744, %v837
      %v854 = vmul.f32 %v745, %v838
      %v855 = vmul.f32 %v746, %v839
      %vm856 = vcmask 1046528
      %v857 = vsel %vm856, %v841, -inf
      %v858 = vmax.f32 %v840, %v857
      %v859 = vrot.slane %v858, 4
      %v860 = vmax.f32 %v858, %v859
      %v861 = vrot.slane %v860, 2
      %v862 = vmax.f32 %v860, %v861
      %v863 = vrot.slane %v862, 1
      %v864 = vmax.f32 %v862, %v863
      %v865 = vsel %vm856, %v843, -inf
      %v866 = vmax.f32 %v842, %v865
      %v867 = vrot.slane %v866, 4
      %v868 = vmax.f32 %v866, %v867
      %v869 = vrot.slane %v868, 2
      %v870 = vmax.f32 %v868, %v869
      %v871 = vrot.slane %v870, 1
      %v872 = vmax.f32 %v870, %v871
      %v873 = vsel %vm856, %v845, -inf
      %v874 = vmax.f32 %v844, %v873
      %v875 = vrot.slane %v874, 4
      %v876 = vmax.f32 %v874, %v875
      %v877 = vrot.slane %v876, 2
      %v878 = vmax.f32 %v876, %v877
      %v879 = vrot.slane %v878, 1
      %v880 = vmax.f32 %v878, %v879
      %v881 = vsel %vm856, %v847, -inf
      %v882 = vmax.f32 %v846, %v881
      %v883 = vrot.slane %v882, 4
      %v884 = vmax.f32 %v882, %v883
      %v885 = vrot.slane %v884, 2
      %v886 = vmax.f32 %v884, %v885
      %v887 = vrot.slane %v886, 1
      %v888 = vmax.f32 %v886, %v887
      %v889 = vsel %vm856, %v849, -inf
      %v890 = vmax.f32 %v848, %v889
      %v891 = vrot.slane %v890, 4
      %v892 = vmax.f32 %v890, %v891
      %v893 = vrot.slane %v892, 2
      %v894 = vmax.f32 %v892, %v893
      %v895 = vrot.slane %v894, 1
      %v896 = vmax.f32 %v894, %v895
      %v897 = vsel %vm856, %v851, -inf
      %v898 = vmax.f32 %v850, %v897
      %v899 = vrot.slane %v898, 4
      %v900 = vmax.f32 %v898, %v899
      %v901 = vrot.slane %v900, 2
      %v902 = vmax.f32 %v900, %v901
      %v903 = vrot.slane %v902, 1
      %v904 = vmax.f32 %v902, %v903
      %v905 = vsel %vm856, %v853, -inf
      %v906 = vmax.f32 %v852, %v905
      %v907 = vrot.slane %v906, 4
      %v908 = vmax.f32 %v906, %v907
      %v909 = vrot.slane %v908, 2
      %v910 = vmax.f32 %v908, %v909
      %v911 = vrot.slane %v910, 1
      %v912 = vmax.f32 %v910, %v911
      %v913 = vsel %vm856, %v855, -inf
      %v914 = vmax.f32 %v854, %v913
      %v915 = vrot.slane %v914, 4
      %v916 = vmax.f32 %v914, %v915
      %v917 = vrot.slane %v916, 2
      %v918 = vmax.f32 %v916, %v917
      %v919 = vrot.slane %v918, 1
      %v920 = vmax.f32 %v918, %v919
      %v921 = vld [vmem:[%s5] sm:$0xff]
      %v922 = vld [vmem:[%s5 + $0x8] sm:$0xff]
      %v923 = vld [vmem:[%s5 + $0x10] sm:$0xff]
      %v924 = vld [vmem:[%s5 + $0x18] sm:$0xff]
      %v925 = vld [vmem:[%s5 + $0x20] sm:$0xff]
      %v926 = vld [vmem:[%s5 + $0x28] sm:$0xff]
      %v927 = vld [vmem:[%s5 + $0x30] sm:$0xff]
      %v928 = vld [vmem:[%s5 + $0x38] sm:$0xff]
      %v929 = vld [vmem:[%s5 + $0x40] sm:$0xff]
      %v930 = vld [vmem:[%s5 + $0x48] sm:$0xff]
      %v931 = vld [vmem:[%s5 + $0x50] sm:$0xff]
      %v932 = vld [vmem:[%s5 + $0x58] sm:$0xff]
      %v933 = vld [vmem:[%s5 + $0x60] sm:$0xff]
      %v934 = vld [vmem:[%s5 + $0x68] sm:$0xff]
      %v935 = vld [vmem:[%s5 + $0x70] sm:$0xff]
      %v936 = vld [vmem:[%s5 + $0x78] sm:$0xff]
      %v937 = vld [vmem:[%s2 + $0x8] sm:$0xff]
      %v938 = vld [vmem:[%s2 + $0x20] sm:$0xff]
      %v939 = vld [vmem:[%s2 + $0x38] sm:$0xff]
      %v940 = vld [vmem:[%s2 + $0x50] sm:$0xff]
      %v941 = vld [vmem:[%s2 + $0x68] sm:$0xff]
      %v942 = vld [vmem:[%s2 + $0x80] sm:$0xff]
      %v943 = vld [vmem:[%s2 + $0x98] sm:$0xff]
      %v944 = vld [vmem:[%s2 + $0xb0] sm:$0xff]
      %v945 = vld [vmem:[%s2 + $0xc8] sm:$0xff]
      %v946 = vld [vmem:[%s2 + $0xe0] sm:$0xff]
      %v947 = vld [vmem:[%s2 + $0xf8] sm:$0xff]
      %v948 = vld [vmem:[%s2 + $0x110] sm:$0xff]
      %v949 = vld [vmem:[%s2 + $0x128] sm:$0xff]
      %v950 = vld [vmem:[%s2 + $0x140] sm:$0xff]
      %v951 = vld [vmem:[%s2 + $0x158] sm:$0xff]
      %v952 = vld [vmem:[%s2 + $0x170] sm:$0xff]
      %v969 = vunpack.c.l.b16 %v937
      %v970 = vunpack.c.h.b16 %v937
      %v971 = vunpack.c.l.b16 %v938
      %v972 = vunpack.c.h.b16 %v938
      %v973 = vunpack.c.l.b16 %v939
      %v974 = vunpack.c.h.b16 %v939
      %v975 = vunpack.c.l.b16 %v940
      %v976 = vunpack.c.h.b16 %v940
      %v977 = vunpack.c.l.b16 %v941
      %v978 = vunpack.c.h.b16 %v941
      %v979 = vunpack.c.l.b16 %v942
      %v980 = vunpack.c.h.b16 %v942
      %v981 = vunpack.c.l.b16 %v943
      %v982 = vunpack.c.h.b16 %v943
      %v983 = vunpack.c.l.b16 %v944
      %v984 = vunpack.c.h.b16 %v944
      %v985 = vunpack.c.l.b16 %v945
      %v986 = vunpack.c.h.b16 %v945
      %v987 = vunpack.c.l.b16 %v946
      %v988 = vunpack.c.h.b16 %v946
      %v989 = vunpack.c.l.b16 %v947
      %v990 = vunpack.c.h.b16 %v947
      %v991 = vunpack.c.l.b16 %v948
      %v992 = vunpack.c.h.b16 %v948
      %v993 = vunpack.c.l.b16 %v949
      %v994 = vunpack.c.h.b16 %v949
      %v995 = vunpack.c.l.b16 %v950
      %v996 = vunpack.c.h.b16 %v950
      %v997 = vunpack.c.l.b16 %v951
      %v998 = vunpack.c.h.b16 %v951
      %v999 = vunpack.c.l.b16 %v952
      %v1000 = vunpack.c.h.b16 %v952
      %v1001 = vpack.c.b16 %v971, %v969
      %v1002 = vpack.c.b16 %v972, %v970
      %v1003 = vpack.c.b16 %v975, %v973
      %v1004 = vpack.c.b16 %v976, %v974
      %v1005 = vpack.c.b16 %v979, %v977
      %v1006 = vpack.c.b16 %v980, %v978
      %v1007 = vpack.c.b16 %v983, %v981
      %v1008 = vpack.c.b16 %v984, %v982
      %v1009 = vpack.c.b16 %v987, %v985
      %v1010 = vpack.c.b16 %v988, %v986
      %v1011 = vpack.c.b16 %v991, %v989
      %v1012 = vpack.c.b16 %v992, %v990
      %v1013 = vpack.c.b16 %v995, %v993
      %v1014 = vpack.c.b16 %v996, %v994
      %v1015 = vpack.c.b16 %v999, %v997
      %v1016 = vpack.c.b16 %v1000, %v998
      %1033 = vmatprep.subr.bf16.mxu0 %v1016
      %1034 = vmatpush1.bf16.msra.mxu0 %v1015
      %1035 = vmatprep.subr.bf16.mxu0 %v1014
      %1036 = vmatpush1.bf16.msra.mxu0 %v1013
      %1037 = vmatprep.subr.bf16.mxu0 %v1012
      %1038 = vmatpush1.bf16.msra.mxu0 %v1011
      %1039 = vmatprep.subr.bf16.mxu0 %v1010
      %1040 = vmatpush1.bf16.msra.mxu0 %v1009
      %1041 = vmatprep.subr.bf16.mxu0 %v1008
      %1042 = vmatpush1.bf16.msra.mxu0 %v1007
      %1043 = vmatprep.subr.bf16.mxu0 %v1006
      %1044 = vmatpush1.bf16.msra.mxu0 %v1005
      %1045 = vmatprep.subr.bf16.mxu0 %v1004
      %1046 = vmatpush1.bf16.msra.mxu0 %v1003
      %1047 = vmatprep.subr.bf16.mxu0 %v1002
      %1048 = vmatpush1.bf16.msra.mxu0 %v1001
      %1049 = vmatprep.subr.bf16.mxu0 0
      %1050 = vmatpush2.bf16.msra.mxu0 0
      %1051 = vmatprep.subr.bf16.mxu0 0
      %1052 = vmatpush2.bf16.msra.mxu0 0
      %1053 = vmatprep.subr.bf16.mxu0 0
      %1054 = vmatpush2.bf16.msra.mxu0 0
      %1055 = vmatprep.subr.bf16.mxu0 0
      %1056 = vmatpush2.bf16.msra.mxu0 0
      %1057 = vmatprep.subr.bf16.mxu0 0
      %1058 = vmatpush2.bf16.msra.mxu0 0
      %1059 = vmatprep.subr.bf16.mxu0 0
      %1060 = vmatpush2.bf16.msra.mxu0 0
      %1061 = vmatprep.subr.bf16.mxu0 0
      %1062 = vmatpush2.bf16.msra.mxu0 0
      %1063 = vmatprep.subr.bf16.mxu0 0
      %1064 = vmatpush2.bf16.msra.mxu0 0
      %1065 = vmatprep.mubr.bf16.mxu0 0
      %1066 = vmatmul.mubr.bf16.gmra.mxu0 %v469
      %v1067 = vpop.f32.mrf.mxu0
      %v1068 = vadd.f32 0.0, %v1067
      %v1069 = vpop.f32.mrf.mxu0
      %v1070 = vadd.f32 0.0, %v1069
      %v1071 = vpop.f32.mrf.mxu0
      %v1072 = vadd.f32 0.0, %v1071
      %v1073 = vpop.f32.mrf.mxu0
      %v1074 = vadd.f32 0.0, %v1073
      %1075 = vmatprep.mubr.bf16.mxu0 0
      %1076 = vmatmul.mubr.bf16.gmra.mxu0 %v470
      %v1077 = vpop.f32.mrf.mxu0
      %v1078 = vpop.f32.mrf.mxu0
      %v1079 = vpop.f32.mrf.mxu0
      %v1080 = vadd.f32 0.0, %v1079
      %v1081 = vpop.f32.mrf.mxu0
      %v1082 = vadd.f32 0.0, %v1081
      %1083 = vmatprep.mubr.bf16.mxu0 0
      %1084 = vmatmul.mubr.bf16.gmra.mxu0 %v471
      %v1085 = vpop.f32.mrf.mxu0
      %v1086 = vadd.f32 0.0, %v1085
      %v1087 = vpop.f32.mrf.mxu0
      %v1088 = vadd.f32 0.0, %v1087
      %v1089 = vpop.f32.mrf.mxu0
      %v1090 = vpop.f32.mrf.mxu0
      %1091 = vmatprep.mubr.bf16.mxu0 0
      %1092 = vmatmul.mubr.bf16.gmra.mxu0 %v472
      %v1093 = vpop.f32.mrf.mxu0
      %v1094 = vadd.f32 0.0, %v1093
      %v1095 = vpop.f32.mrf.mxu0
      %v1096 = vadd.f32 0.0, %v1095
      %v1097 = vpop.f32.mrf.mxu0
      %v1098 = vadd.f32 0.0, %v1097
      %v1099 = vpop.f32.mrf.mxu0
      %v1100 = vadd.f32 0.0, %v1099
      %1101 = vmatprep.mubr.bf16.mxu0 0
      %1102 = vmatmul.mubr.bf16.gmra.mxu0 %v473
      %v1103 = vpop.f32.mrf.mxu0
      %v1104 = vpop.f32.mrf.mxu0
      %v1105 = vpop.f32.mrf.mxu0
      %v1106 = vadd.f32 0.0, %v1105
      %v1107 = vpop.f32.mrf.mxu0
      %v1108 = vadd.f32 0.0, %v1107
      %1109 = vmatprep.mubr.bf16.mxu0 0
      %1110 = vmatmul.mubr.bf16.gmra.mxu0 %v474
      %v1111 = vpop.f32.mrf.mxu0
      %v1112 = vadd.f32 0.0, %v1111
      %v1113 = vpop.f32.mrf.mxu0
      %v1114 = vadd.f32 0.0, %v1113
      %v1115 = vpop.f32.mrf.mxu0
      %v1116 = vpop.f32.mrf.mxu0
      %1117 = vmatprep.mubr.bf16.mxu0 0
      %1118 = vmatmul.mubr.bf16.gmra.mxu0 %v475
      %v1119 = vpop.f32.mrf.mxu0
      %v1120 = vadd.f32 0.0, %v1119
      %v1121 = vpop.f32.mrf.mxu0
      %v1122 = vadd.f32 0.0, %v1121
      %v1123 = vpop.f32.mrf.mxu0
      %v1124 = vadd.f32 0.0, %v1123
      %v1125 = vpop.f32.mrf.mxu0
      %v1126 = vadd.f32 0.0, %v1125
      %1127 = vmatprep.mubr.bf16.mxu0 0
      %1128 = vmatmul.mubr.bf16.gmra.mxu0 %v476
      %v1129 = vpop.f32.mrf.mxu0
      %v1130 = vpop.f32.mrf.mxu0
      %v1131 = vpop.f32.mrf.mxu0
      %v1132 = vadd.f32 0.0, %v1131
      %v1133 = vpop.f32.mrf.mxu0
      %v1134 = vadd.f32 0.0, %v1133
      %1135 = vmatprep.mubr.bf16.mxu0 0
      %1136 = vmatmul.mubr.bf16.gmra.mxu0 %v477
      %v1137 = vpop.f32.mrf.mxu0
      %v1138 = vadd.f32 0.0, %v1137
      %v1139 = vpop.f32.mrf.mxu0
      %v1140 = vadd.f32 0.0, %v1139
      %v1141 = vpop.f32.mrf.mxu0
      %v1142 = vpop.f32.mrf.mxu0
      %1143 = vmatprep.mubr.bf16.mxu0 0
      %1144 = vmatmul.mubr.bf16.gmra.mxu0 %v478
      %v1145 = vpop.f32.mrf.mxu0
      %v1146 = vadd.f32 0.0, %v1145
      %v1147 = vpop.f32.mrf.mxu0
      %v1148 = vadd.f32 0.0, %v1147
      %v1149 = vpop.f32.mrf.mxu0
      %v1150 = vadd.f32 0.0, %v1149
      %v1151 = vpop.f32.mrf.mxu0
      %v1152 = vadd.f32 0.0, %v1151
      %1153 = vmatprep.mubr.bf16.mxu0 0
      %1154 = vmatmul.mubr.bf16.gmra.mxu0 %v479
      %v1155 = vpop.f32.mrf.mxu0
      %v1156 = vpop.f32.mrf.mxu0
      %v1157 = vpop.f32.mrf.mxu0
      %v1158 = vadd.f32 0.0, %v1157
      %v1159 = vpop.f32.mrf.mxu0
      %v1160 = vadd.f32 0.0, %v1159
      %1161 = vmatprep.mubr.bf16.mxu0 0
      %1162 = vmatmul.mubr.bf16.gmra.mxu0 %v480
      %v1163 = vpop.f32.mrf.mxu0
      %v1164 = vadd.f32 0.0, %v1163
      %v1165 = vpop.f32.mrf.mxu0
      %v1166 = vadd.f32 0.0, %v1165
      %v1167 = vpop.f32.mrf.mxu0
      %v1168 = vpop.f32.mrf.mxu0
      %1169 = vdwg.mxu0
      %v1170 = vld [vmem:[%s4 + $0x1] sm:$0x1]
      %v1171 = vlaneseq
      %v1172 = vshrl.u32 %v1171, 7
      %v1173 = vsub.s32 0, %v1172
      %v1174 = vrot.slane %v1170, %v1173
      %v1175 = vadd.f32 %v1068, %v1174
      %v1176 = vadd.f32 %v1072, %v1174
      %v1177 = vadd.f32 %v1080, %v1174
      %v1178 = vadd.f32 %v1086, %v1174
      %v1179 = vadd.f32 %v1094, %v1174
      %v1180 = vadd.f32 %v1098, %v1174
      %v1181 = vadd.f32 %v1106, %v1174
      %v1182 = vadd.f32 %v1112, %v1174
      %v1183 = vadd.f32 %v1120, %v1174
      %v1184 = vadd.f32 %v1124, %v1174
      %v1185 = vadd.f32 %v1132, %v1174
      %v1186 = vadd.f32 %v1138, %v1174
      %v1187 = vadd.f32 %v1146, %v1174
      %v1188 = vadd.f32 %v1150, %v1174
      %v1189 = vadd.f32 %v1158, %v1174
      %v1190 = vadd.f32 %v1164, %v1174
      %v1191 = vtanh.pop %v1175
      %v1192 = vtanh.pop %v1176
      %v1193 = vtanh.pop %v1177
      %v1194 = vtanh.pop %v1178
      %v1195 = vtanh.pop %v1179
      %v1196 = vtanh.pop %v1180
      %v1197 = vtanh.pop %v1181
      %v1198 = vtanh.pop %v1182
      %v1199 = vtanh.pop %v1183
      %v1200 = vtanh.pop %v1184
      %v1201 = vtanh.pop %v1185
      %v1202 = vtanh.pop %v1186
      %v1203 = vtanh.pop %v1187
      %v1204 = vtanh.pop %v1188
      %v1205 = vtanh.pop %v1189
      %v1206 = vtanh.pop %v1190
      %v1207 = vld [vmem:[%s4 + $0x4] sm:$0x1]
      %v1208 = vlaneseq
      %v1209 = vshrl.u32 %v1208, 7
      %v1210 = vsub.s32 0, %v1209
      %v1211 = vrot.slane %v1207, %v1210
      %v1212 = vadd.f32 %v1070, %v1211
      %v1213 = vadd.f32 %v1074, %v1211
      %v1214 = vadd.f32 %v1082, %v1211
      %v1215 = vadd.f32 %v1088, %v1211
      %v1216 = vadd.f32 %v1096, %v1211
      %v1217 = vadd.f32 %v1100, %v1211
      %v1218 = vadd.f32 %v1108, %v1211
      %v1219 = vadd.f32 %v1114, %v1211
      %v1220 = vadd.f32 %v1122, %v1211
      %v1221 = vadd.f32 %v1126, %v1211
      %v1222 = vadd.f32 %v1134, %v1211
      %v1223 = vadd.f32 %v1140, %v1211
      %v1224 = vadd.f32 %v1148, %v1211
      %v1225 = vadd.f32 %v1152, %v1211
      %v1226 = vadd.f32 %v1160, %v1211
      %v1227 = vadd.f32 %v1166, %v1211
      %v1228 = vadd.f32 %v1212, %v771
      %v1229 = vadd.f32 %v1213, %v771
      %v1230 = vadd.f32 %v1214, %v775
      %v1231 = vadd.f32 %v1215, %v775
      %v1232 = vadd.f32 %v1216, %v779
      %v1233 = vadd.f32 %v1217, %v779
      %v1234 = vadd.f32 %v1218, %v783
      %v1235 = vadd.f32 %v1219, %v783
      %v1236 = vadd.f32 %v1220, %v787
      %v1237 = vadd.f32 %v1221, %v787
      %v1238 = vadd.f32 %v1222, %v791
      %v1239 = vadd.f32 %v1223, %v791
      %v1240 = vadd.f32 %v1224, %v795
      %v1241 = vadd.f32 %v1225, %v795
      %v1242 = vadd.f32 %v1226, %v799
      %v1243 = vadd.f32 %v1227, %v799
      %v1244 = vmax.f32 %v1228, 0.0
      %v1245 = vmax.f32 %v1229, 0.0
      %v1246 = vmax.f32 %v1230, 0.0
      %v1247 = vmax.f32 %v1231, 0.0
      %v1248 = vmax.f32 %v1232, 0.0
      %v1249 = vmax.f32 %v1233, 0.0
      %v1250 = vmax.f32 %v1234, 0.0
      %v1251 = vmax.f32 %v1235, 0.0
      %v1252 = vmax.f32 %v1236, 0.0
      %v1253 = vmax.f32 %v1237, 0.0
      %v1254 = vmax.f32 %v1238, 0.0
      %v1255 = vmax.f32 %v1239, 0.0
      %v1256 = vmax.f32 %v1240, 0.0
      %v1257 = vmax.f32 %v1241, 0.0
      %v1258 = vmax.f32 %v1242, 0.0
      %v1259 = vmax.f32 %v1243, 0.0
      %v1260 = vmul.f32 %v1191, %v1244
      %v1261 = vmul.f32 %v1192, %v1245
      %v1262 = vmul.f32 %v1193, %v1246
      %v1263 = vmul.f32 %v1194, %v1247
      %v1264 = vmul.f32 %v1195, %v1248
      %v1265 = vmul.f32 %v1196, %v1249
      %v1266 = vmul.f32 %v1197, %v1250
      %v1267 = vmul.f32 %v1198, %v1251
      %v1268 = vmul.f32 %v1199, %v1252
      %v1269 = vmul.f32 %v1200, %v1253
      %v1270 = vmul.f32 %v1201, %v1254
      %v1271 = vmul.f32 %v1202, %v1255
      %v1272 = vmul.f32 %v1203, %v1256
      %v1273 = vmul.f32 %v1204, %v1257
      %v1274 = vmul.f32 %v1205, %v1258
      %v1275 = vmul.f32 %v1206, %v1259
      %vm1276 = vcmask 1045504
      %v1277 = vsel %vm1276, %v1261, -inf
      %v1278 = vmax.f32 %v1260, %v1277
      %v1279 = vrot.slane %v1278, 4
      %v1280 = vmax.f32 %v1278, %v1279
      %v1281 = vrot.slane %v1280, 2
      %v1282 = vmax.f32 %v1280, %v1281
      %v1283 = vrot.slane %v1282, 1
      %v1284 = vmax.f32 %v1282, %v1283
      %v1285 = vsel %vm1276, %v1263, -inf
      %v1286 = vmax.f32 %v1262, %v1285
      %v1287 = vrot.slane %v1286, 4
      %v1288 = vmax.f32 %v1286, %v1287
      %v1289 = vrot.slane %v1288, 2
      %v1290 = vmax.f32 %v1288, %v1289
      %v1291 = vrot.slane %v1290, 1
      %v1292 = vmax.f32 %v1290, %v1291
      %v1293 = vsel %vm1276, %v1265, -inf
      %v1294 = vmax.f32 %v1264, %v1293
      %v1295 = vrot.slane %v1294, 4
      %v1296 = vmax.f32 %v1294, %v1295
      %v1297 = vrot.slane %v1296, 2
      %v1298 = vmax.f32 %v1296, %v1297
      %v1299 = vrot.slane %v1298, 1
      %v1300 = vmax.f32 %v1298, %v1299
      %v1301 = vsel %vm1276, %v1267, -inf
      %v1302 = vmax.f32 %v1266, %v1301
      %v1303 = vrot.slane %v1302, 4
      %v1304 = vmax.f32 %v1302, %v1303
      %v1305 = vrot.slane %v1304, 2
      %v1306 = vmax.f32 %v1304, %v1305
      %v1307 = vrot.slane %v1306, 1
      %v1308 = vmax.f32 %v1306, %v1307
      %v1309 = vsel %vm1276, %v1269, -inf
      %v1310 = vmax.f32 %v1268, %v1309
      %v1311 = vrot.slane %v1310, 4
      %v1312 = vmax.f32 %v1310, %v1311
      %v1313 = vrot.slane %v1312, 2
      %v1314 = vmax.f32 %v1312, %v1313
      %v1315 = vrot.slane %v1314, 1
      %v1316 = vmax.f32 %v1314, %v1315
      %v1317 = vsel %vm1276, %v1271, -inf
      %v1318 = vmax.f32 %v1270, %v1317
      %v1319 = vrot.slane %v1318, 4
      %v1320 = vmax.f32 %v1318, %v1319
      %v1321 = vrot.slane %v1320, 2
      %v1322 = vmax.f32 %v1320, %v1321
      %v1323 = vrot.slane %v1322, 1
      %v1324 = vmax.f32 %v1322, %v1323
      %v1325 = vsel %vm1276, %v1273, -inf
      %v1326 = vmax.f32 %v1272, %v1325
      %v1327 = vrot.slane %v1326, 4
      %v1328 = vmax.f32 %v1326, %v1327
      %v1329 = vrot.slane %v1328, 2
      %v1330 = vmax.f32 %v1328, %v1329
      %v1331 = vrot.slane %v1330, 1
      %v1332 = vmax.f32 %v1330, %v1331
      %v1333 = vsel %vm1276, %v1275, -inf
      %v1334 = vmax.f32 %v1274, %v1333
      %v1335 = vrot.slane %v1334, 4
      %v1336 = vmax.f32 %v1334, %v1335
      %v1337 = vrot.slane %v1336, 2
      %v1338 = vmax.f32 %v1336, %v1337
      %v1339 = vrot.slane %v1338, 1
      %v1340 = vmax.f32 %v1338, %v1339
      %v1341 = vld [vmem:[%s5 + $0x80] sm:$0xff]
      %v1342 = vld [vmem:[%s5 + $0x88] sm:$0xff]
      %v1343 = vld [vmem:[%s5 + $0x90] sm:$0xff]
      %v1344 = vld [vmem:[%s5 + $0x98] sm:$0xff]
      %v1345 = vld [vmem:[%s5 + $0xa0] sm:$0xff]
      %v1346 = vld [vmem:[%s5 + $0xa8] sm:$0xff]
      %v1347 = vld [vmem:[%s5 + $0xb0] sm:$0xff]
      %v1348 = vld [vmem:[%s5 + $0xb8] sm:$0xff]
      %v1349 = vld [vmem:[%s5 + $0xc0] sm:$0xff]
      %v1350 = vld [vmem:[%s5 + $0xc8] sm:$0xff]
      %v1351 = vld [vmem:[%s5 + $0xd0] sm:$0xff]
      %v1352 = vld [vmem:[%s5 + $0xd8] sm:$0xff]
      %v1353 = vld [vmem:[%s5 + $0xe0] sm:$0xff]
      %v1354 = vld [vmem:[%s5 + $0xe8] sm:$0xff]
      %v1355 = vld [vmem:[%s5 + $0xf0] sm:$0xff]
      %v1356 = vld [vmem:[%s5 + $0xf8] sm:$0xff]
      %vm1365 = vcmask 1041409
      %v1366 = vsel %vm1365, %v1292, %v1284
      %vm1367 = vcmask 1042434
      %v1368 = vsel %vm1367, %v1300, %v1366
      %vm1369 = vcmask 1043459
      %v1370 = vsel %vm1369, %v1308, %v1368
      %vm1371 = vcmask 1044484
      %v1372 = vsel %vm1371, %v1316, %v1370
      %vm1373 = vcmask 1045509
      %v1374 = vsel %vm1373, %v1324, %v1372
      %vm1375 = vcmask 1046534
      %v1376 = vsel %vm1375, %v1332, %v1374
      %vm1377 = vcmask 1047559
      %v1378 = vsel %vm1377, %v1340, %v1376
      %1380 = vmatprep.subr.mxu0 0.0
      %1381 = vmatpush1.msra.mxu0 %v1356
      %1382 = vmatprep.subr.mxu0 0.0
      %1383 = vmatpush1.msra.mxu0 %v1355
      %1384 = vmatprep.subr.mxu0 0.0
      %1385 = vmatpush1.msra.mxu0 %v1354
      %1386 = vmatprep.subr.mxu0 0.0
      %1387 = vmatpush1.msra.mxu0 %v1353
      %1388 = vmatprep.subr.mxu0 0.0
      %1389 = vmatpush1.msra.mxu0 %v1352
      %1390 = vmatprep.subr.mxu0 0.0
      %1391 = vmatpush1.msra.mxu0 %v1351
      %1392 = vmatprep.subr.mxu0 0.0
      %1393 = vmatpush1.msra.mxu0 %v1350
      %1394 = vmatprep.subr.mxu0 0.0
      %1395 = vmatpush1.msra.mxu0 %v1349
      %1396 = vmatprep.subr.mxu0 0.0
      %1397 = vmatpush1.msra.mxu0 %v1348
      %1398 = vmatprep.subr.mxu0 0.0
      %1399 = vmatpush1.msra.mxu0 %v1347
      %1400 = vmatprep.subr.mxu0 0.0
      %1401 = vmatpush1.msra.mxu0 %v1346
      %1402 = vmatprep.subr.mxu0 0.0
      %1403 = vmatpush1.msra.mxu0 %v1345
      %1404 = vmatprep.subr.mxu0 0.0
      %1405 = vmatpush1.msra.mxu0 %v1344
      %1406 = vmatprep.subr.mxu0 0.0
      %1407 = vmatpush1.msra.mxu0 %v1343
      %1408 = vmatprep.subr.mxu0 0.0
      %1409 = vmatpush1.msra.mxu0 %v1342
      %1410 = vmatprep.subr.mxu0 0.0
      %1411 = vmatpush1.msra.mxu0 %v1341
      %1412 = vmatprep.subr.mxu0 0.0
      %1413 = vmatpush2.msra.mxu0 0.0
      %1414 = vmatprep.subr.mxu0 0.0
      %1415 = vmatpush2.msra.mxu0 0.0
      %1416 = vmatprep.subr.mxu0 0.0
      %1417 = vmatpush2.msra.mxu0 0.0
      %1418 = vmatprep.subr.mxu0 0.0
      %1419 = vmatpush2.msra.mxu0 0.0
      %1420 = vmatprep.subr.mxu0 0.0
      %1421 = vmatpush2.msra.mxu0 0.0
      %1422 = vmatprep.subr.mxu0 0.0
      %1423 = vmatpush2.msra.mxu0 0.0
      %1424 = vmatprep.subr.mxu0 0.0
      %1425 = vmatpush2.msra.mxu0 0.0
      %1426 = vmatprep.subr.mxu0 0.0
      %1427 = vmatpush2.msra.mxu0 0.0
      %1428 = vmatprep.subr.mxu0 0.0
      %1429 = vmatpush2.msra.mxu0 0.0
      %1430 = vmatprep.subr.mxu0 0.0
      %1431 = vmatpush2.msra.mxu0 0.0
      %1432 = vmatprep.subr.mxu0 0.0
      %1433 = vmatpush2.msra.mxu0 0.0
      %1434 = vmatprep.subr.mxu0 0.0
      %1435 = vmatpush2.msra.mxu0 0.0
      %1436 = vmatprep.subr.mxu0 0.0
      %1437 = vmatpush2.msra.mxu0 0.0
      %1438 = vmatprep.subr.mxu0 0.0
      %1439 = vmatpush2.msra.mxu0 0.0
      %1440 = vmatprep.subr.mxu0 0.0
      %1441 = vmatpush2.msra.mxu0 0.0
      %1442 = vmatprep.subr.mxu0 0.0
      %1443 = vmatpush2.msra.mxu0 0.0
      %1444 = vmatprep.mubr.f32.mxu0 0.0
      %1445 = vmatmul.mubr.f32.gmra.mxu0 %v1378
      %v1446 = vpop.f32.mrf.mxu0
      %v1447 = vadd.f32 0.0, %v1446
      %v1448 = vpop.f32.mrf.mxu0
      %1449 = vdwg.mxu0
      %v1458 = vsel %vm1365, %v872, %v864
      %v1459 = vsel %vm1367, %v880, %v1458
      %v1460 = vsel %vm1369, %v888, %v1459
      %v1461 = vsel %vm1371, %v896, %v1460
      %v1462 = vsel %vm1373, %v904, %v1461
      %v1463 = vsel %vm1375, %v912, %v1462
      %v1464 = vsel %vm1377, %v920, %v1463
      %1466 = vmatprep.subr.mxu0 0.0
      %1467 = vmatpush1.msra.mxu0 %v936
      %1468 = vmatprep.subr.mxu0 0.0
      %1469 = vmatpush1.msra.mxu0 %v935
      %1470 = vmatprep.subr.mxu0 0.0
      %1471 = vmatpush1.msra.mxu0 %v934
      %1472 = vmatprep.subr.mxu0 0.0
      %1473 = vmatpush1.msra.mxu0 %v933
      %1474 = vmatprep.subr.mxu0 0.0
      %1475 = vmatpush1.msra.mxu0 %v932
      %1476 = vmatprep.subr.mxu0 0.0
      %1477 = vmatpush1.msra.mxu0 %v931
      %1478 = vmatprep.subr.mxu0 0.0
      %1479 = vmatpush1.msra.mxu0 %v930
      %1480 = vmatprep.subr.mxu0 0.0
      %1481 = vmatpush1.msra.mxu0 %v929
      %1482 = vmatprep.subr.mxu0 0.0
      %1483 = vmatpush1.msra.mxu0 %v928
      %1484 = vmatprep.subr.mxu0 0.0
      %1485 = vmatpush1.msra.mxu0 %v927
      %1486 = vmatprep.subr.mxu0 0.0
      %1487 = vmatpush1.msra.mxu0 %v926
      %1488 = vmatprep.subr.mxu0 0.0
      %1489 = vmatpush1.msra.mxu0 %v925
      %1490 = vmatprep.subr.mxu0 0.0
      %1491 = vmatpush1.msra.mxu0 %v924
      %1492 = vmatprep.subr.mxu0 0.0
      %1493 = vmatpush1.msra.mxu0 %v923
      %1494 = vmatprep.subr.mxu0 0.0
      %1495 = vmatpush1.msra.mxu0 %v922
      %1496 = vmatprep.subr.mxu0 0.0
      %1497 = vmatpush1.msra.mxu0 %v921
      %1498 = vmatprep.subr.mxu0 0.0
      %1499 = vmatpush2.msra.mxu0 0.0
      %1500 = vmatprep.subr.mxu0 0.0
      %1501 = vmatpush2.msra.mxu0 0.0
      %1502 = vmatprep.subr.mxu0 0.0
      %1503 = vmatpush2.msra.mxu0 0.0
      %1504 = vmatprep.subr.mxu0 0.0
      %1505 = vmatpush2.msra.mxu0 0.0
      %1506 = vmatprep.subr.mxu0 0.0
      %1507 = vmatpush2.msra.mxu0 0.0
      %1508 = vmatprep.subr.mxu0 0.0
      %1509 = vmatpush2.msra.mxu0 0.0
      %1510 = vmatprep.subr.mxu0 0.0
      %1511 = vmatpush2.msra.mxu0 0.0
      %1512 = vmatprep.subr.mxu0 0.0
      %1513 = vmatpush2.msra.mxu0 0.0
      %1514 = vmatprep.subr.mxu0 0.0
      %1515 = vmatpush2.msra.mxu0 0.0
      %1516 = vmatprep.subr.mxu0 0.0
      %1517 = vmatpush2.msra.mxu0 0.0
      %1518 = vmatprep.subr.mxu0 0.0
      %1519 = vmatpush2.msra.mxu0 0.0
      %1520 = vmatprep.subr.mxu0 0.0
      %1521 = vmatpush2.msra.mxu0 0.0
      %1522 = vmatprep.subr.mxu0 0.0
      %1523 = vmatpush2.msra.mxu0 0.0
      %1524 = vmatprep.subr.mxu0 0.0
      %1525 = vmatpush2.msra.mxu0 0.0
      %1526 = vmatprep.subr.mxu0 0.0
      %1527 = vmatpush2.msra.mxu0 0.0
      %1528 = vmatprep.subr.mxu0 0.0
      %1529 = vmatpush2.msra.mxu0 0.0
      %1530 = vmatprep.mubr.f32.mxu0 0.0
      %1531 = vmatmul.mubr.f32.gmra.mxu0 %v1464
      %v1532 = vpop.f32.mrf.mxu0
      %v1533 = vadd.f32 %v1447, %v1532
      %v1534 = vpop.f32.mrf.mxu0
      %1535 = vdwg.mxu0
      %v1536 = vld [vmem:[%s2 + $0x10] sm:$0xff]
      %v1537 = vld [vmem:[%s2 + $0x28] sm:$0xff]
      %v1538 = vld [vmem:[%s2 + $0x40] sm:$0xff]
      %v1539 = vld [vmem:[%s2 + $0x58] sm:$0xff]
      %v1540 = vld [vmem:[%s2 + $0x70] sm:$0xff]
      %v1541 = vld [vmem:[%s2 + $0x88] sm:$0xff]
      %v1542 = vld [vmem:[%s2 + $0xa0] sm:$0xff]
      %v1543 = vld [vmem:[%s2 + $0xb8] sm:$0xff]
      %v1544 = vld [vmem:[%s2 + $0xd0] sm:$0xff]
      %v1545 = vld [vmem:[%s2 + $0xe8] sm:$0xff]
      %v1546 = vld [vmem:[%s2 + $0x100] sm:$0xff]
      %v1547 = vld [vmem:[%s2 + $0x118] sm:$0xff]
      %v1548 = vld [vmem:[%s2 + $0x130] sm:$0xff]
      %v1549 = vld [vmem:[%s2 + $0x148] sm:$0xff]
      %v1550 = vld [vmem:[%s2 + $0x160] sm:$0xff]
      %v1551 = vld [vmem:[%s2 + $0x178] sm:$0xff]
      %v1568 = vunpack.c.l.b16 %v1536
      %v1569 = vunpack.c.h.b16 %v1536
      %v1570 = vunpack.c.l.b16 %v1537
      %v1571 = vunpack.c.h.b16 %v1537
      %v1572 = vunpack.c.l.b16 %v1538
      %v1573 = vunpack.c.h.b16 %v1538
      %v1574 = vunpack.c.l.b16 %v1539
      %v1575 = vunpack.c.h.b16 %v1539
      %v1576 = vunpack.c.l.b16 %v1540
      %v1577 = vunpack.c.h.b16 %v1540
      %v1578 = vunpack.c.l.b16 %v1541
      %v1579 = vunpack.c.h.b16 %v1541
      %v1580 = vunpack.c.l.b16 %v1542
      %v1581 = vunpack.c.h.b16 %v1542
      %v1582 = vunpack.c.l.b16 %v1543
      %v1583 = vunpack.c.h.b16 %v1543
      %v1584 = vunpack.c.l.b16 %v1544
      %v1585 = vunpack.c.h.b16 %v1544
      %v1586 = vunpack.c.l.b16 %v1545
      %v1587 = vunpack.c.h.b16 %v1545
      %v1588 = vunpack.c.l.b16 %v1546
      %v1589 = vunpack.c.h.b16 %v1546
      %v1590 = vunpack.c.l.b16 %v1547
      %v1591 = vunpack.c.h.b16 %v1547
      %v1592 = vunpack.c.l.b16 %v1548
      %v1593 = vunpack.c.h.b16 %v1548
      %v1594 = vunpack.c.l.b16 %v1549
      %v1595 = vunpack.c.h.b16 %v1549
      %v1596 = vunpack.c.l.b16 %v1550
      %v1597 = vunpack.c.h.b16 %v1550
      %v1598 = vunpack.c.l.b16 %v1551
      %v1599 = vunpack.c.h.b16 %v1551
      %v1600 = vpack.c.b16 %v1570, %v1568
      %v1601 = vpack.c.b16 %v1571, %v1569
      %v1602 = vpack.c.b16 %v1574, %v1572
      %v1603 = vpack.c.b16 %v1575, %v1573
      %v1604 = vpack.c.b16 %v1578, %v1576
      %v1605 = vpack.c.b16 %v1579, %v1577
      %v1606 = vpack.c.b16 %v1582, %v1580
      %v1607 = vpack.c.b16 %v1583, %v1581
      %v1608 = vpack.c.b16 %v1586, %v1584
      %v1609 = vpack.c.b16 %v1587, %v1585
      %v1610 = vpack.c.b16 %v1590, %v1588
      %v1611 = vpack.c.b16 %v1591, %v1589
      %v1612 = vpack.c.b16 %v1594, %v1592
      %v1613 = vpack.c.b16 %v1595, %v1593
      %v1614 = vpack.c.b16 %v1598, %v1596
      %v1615 = vpack.c.b16 %v1599, %v1597
      %1632 = vmatprep.subr.bf16.mxu0 %v1615
      %1633 = vmatpush1.bf16.msra.mxu0 %v1614
      %1634 = vmatprep.subr.bf16.mxu0 %v1613
      %1635 = vmatpush1.bf16.msra.mxu0 %v1612
      %1636 = vmatprep.subr.bf16.mxu0 %v1611
      %1637 = vmatpush1.bf16.msra.mxu0 %v1610
      %1638 = vmatprep.subr.bf16.mxu0 %v1609
      %1639 = vmatpush1.bf16.msra.mxu0 %v1608
      %1640 = vmatprep.subr.bf16.mxu0 %v1607
      %1641 = vmatpush1.bf16.msra.mxu0 %v1606
      %1642 = vmatprep.subr.bf16.mxu0 %v1605
      %1643 = vmatpush1.bf16.msra.mxu0 %v1604
      %1644 = vmatprep.subr.bf16.mxu0 %v1603
      %1645 = vmatpush1.bf16.msra.mxu0 %v1602
      %1646 = vmatprep.subr.bf16.mxu0 %v1601
      %1647 = vmatpush1.bf16.msra.mxu0 %v1600
      %1648 = vmatprep.subr.bf16.mxu0 0
      %1649 = vmatpush2.bf16.msra.mxu0 0
      %1650 = vmatprep.subr.bf16.mxu0 0
      %1651 = vmatpush2.bf16.msra.mxu0 0
      %1652 = vmatprep.subr.bf16.mxu0 0
      %1653 = vmatpush2.bf16.msra.mxu0 0
      %1654 = vmatprep.subr.bf16.mxu0 0
      %1655 = vmatpush2.bf16.msra.mxu0 0
      %1656 = vmatprep.subr.bf16.mxu0 0
      %1657 = vmatpush2.bf16.msra.mxu0 0
      %1658 = vmatprep.subr.bf16.mxu0 0
      %1659 = vmatpush2.bf16.msra.mxu0 0
      %1660 = vmatprep.subr.bf16.mxu0 0
      %1661 = vmatpush2.bf16.msra.mxu0 0
      %1662 = vmatprep.subr.bf16.mxu0 0
      %1663 = vmatpush2.bf16.msra.mxu0 0
      %1664 = vmatprep.mubr.bf16.mxu0 0
      %1665 = vmatmul.mubr.bf16.gmra.mxu0 %v469
      %v1666 = vpop.f32.mrf.mxu0
      %v1667 = vadd.f32 0.0, %v1666
      %v1668 = vpop.f32.mrf.mxu0
      %v1669 = vadd.f32 0.0, %v1668
      %v1670 = vpop.f32.mrf.mxu0
      %v1671 = vadd.f32 0.0, %v1670
      %v1672 = vpop.f32.mrf.mxu0
      %v1673 = vadd.f32 0.0, %v1672
      %1674 = vmatprep.mubr.bf16.mxu0 0
      %1675 = vmatmul.mubr.bf16.gmra.mxu0 %v470
      %v1676 = vpop.f32.mrf.mxu0
      %v1677 = vpop.f32.mrf.mxu0
      %v1678 = vpop.f32.mrf.mxu0
      %v1679 = vadd.f32 0.0, %v1678
      %v1680 = vpop.f32.mrf.mxu0
      %v1681 = vadd.f32 0.0, %v1680
      %1682 = vmatprep.mubr.bf16.mxu0 0
      %1683 = vmatmul.mubr.bf16.gmra.mxu0 %v471
      %v1684 = vpop.f32.mrf.mxu0
      %v1685 = vadd.f32 0.0, %v1684
      %v1686 = vpop.f32.mrf.mxu0
      %v1687 = vadd.f32 0.0, %v1686
      %v1688 = vpop.f32.mrf.mxu0
      %v1689 = vpop.f32.mrf.mxu0
      %1690 = vmatprep.mubr.bf16.mxu0 0
      %1691 = vmatmul.mubr.bf16.gmra.mxu0 %v472
      %v1692 = vpop.f32.mrf.mxu0
      %v1693 = vadd.f32 0.0, %v1692
      %v1694 = vpop.f32.mrf.mxu0
      %v1695 = vadd.f32 0.0, %v1694
      %v1696 = vpop.f32.mrf.mxu0
      %v1697 = vadd.f32 0.0, %v1696
      %v1698 = vpop.f32.mrf.mxu0
      %v1699 = vadd.f32 0.0, %v1698
      %1700 = vmatprep.mubr.bf16.mxu0 0
      %1701 = vmatmul.mubr.bf16.gmra.mxu0 %v473
      %v1702 = vpop.f32.mrf.mxu0
      %v1703 = vpop.f32.mrf.mxu0
      %v1704 = vpop.f32.mrf.mxu0
      %v1705 = vadd.f32 0.0, %v1704
      %v1706 = vpop.f32.mrf.mxu0
      %v1707 = vadd.f32 0.0, %v1706
      %1708 = vmatprep.mubr.bf16.mxu0 0
      %1709 = vmatmul.mubr.bf16.gmra.mxu0 %v474
      %v1710 = vpop.f32.mrf.mxu0
      %v1711 = vadd.f32 0.0, %v1710
      %v1712 = vpop.f32.mrf.mxu0
      %v1713 = vadd.f32 0.0, %v1712
      %v1714 = vpop.f32.mrf.mxu0
      %v1715 = vpop.f32.mrf.mxu0
      %1716 = vmatprep.mubr.bf16.mxu0 0
      %1717 = vmatmul.mubr.bf16.gmra.mxu0 %v475
      %v1718 = vpop.f32.mrf.mxu0
      %v1719 = vadd.f32 0.0, %v1718
      %v1720 = vpop.f32.mrf.mxu0
      %v1721 = vadd.f32 0.0, %v1720
      %v1722 = vpop.f32.mrf.mxu0
      %v1723 = vadd.f32 0.0, %v1722
      %v1724 = vpop.f32.mrf.mxu0
      %v1725 = vadd.f32 0.0, %v1724
      %1726 = vmatprep.mubr.bf16.mxu0 0
      %1727 = vmatmul.mubr.bf16.gmra.mxu0 %v476
      %v1728 = vpop.f32.mrf.mxu0
      %v1729 = vpop.f32.mrf.mxu0
      %v1730 = vpop.f32.mrf.mxu0
      %v1731 = vadd.f32 0.0, %v1730
      %v1732 = vpop.f32.mrf.mxu0
      %v1733 = vadd.f32 0.0, %v1732
      %1734 = vmatprep.mubr.bf16.mxu0 0
      %1735 = vmatmul.mubr.bf16.gmra.mxu0 %v477
      %v1736 = vpop.f32.mrf.mxu0
      %v1737 = vadd.f32 0.0, %v1736
      %v1738 = vpop.f32.mrf.mxu0
      %v1739 = vadd.f32 0.0, %v1738
      %v1740 = vpop.f32.mrf.mxu0
      %v1741 = vpop.f32.mrf.mxu0
      %1742 = vmatprep.mubr.bf16.mxu0 0
      %1743 = vmatmul.mubr.bf16.gmra.mxu0 %v478
      %v1744 = vpop.f32.mrf.mxu0
      %v1745 = vadd.f32 0.0, %v1744
      %v1746 = vpop.f32.mrf.mxu0
      %v1747 = vadd.f32 0.0, %v1746
      %v1748 = vpop.f32.mrf.mxu0
      %v1749 = vadd.f32 0.0, %v1748
      %v1750 = vpop.f32.mrf.mxu0
      %v1751 = vadd.f32 0.0, %v1750
      %1752 = vmatprep.mubr.bf16.mxu0 0
      %1753 = vmatmul.mubr.bf16.gmra.mxu0 %v479
      %v1754 = vpop.f32.mrf.mxu0
      %v1755 = vpop.f32.mrf.mxu0
      %v1756 = vpop.f32.mrf.mxu0
      %v1757 = vadd.f32 0.0, %v1756
      %v1758 = vpop.f32.mrf.mxu0
      %v1759 = vadd.f32 0.0, %v1758
      %1760 = vmatprep.mubr.bf16.mxu0 0
      %1761 = vmatmul.mubr.bf16.gmra.mxu0 %v480
      %v1762 = vpop.f32.mrf.mxu0
      %v1763 = vadd.f32 0.0, %v1762
      %v1764 = vpop.f32.mrf.mxu0
      %v1765 = vadd.f32 0.0, %v1764
      %v1766 = vpop.f32.mrf.mxu0
      %v1767 = vpop.f32.mrf.mxu0
      %1768 = vdwg.mxu0
      %v1769 = vld [vmem:[%s4 + $0x2] sm:$0x1]
      %v1770 = vlaneseq
      %v1771 = vshrl.u32 %v1770, 7
      %v1772 = vsub.s32 0, %v1771
      %v1773 = vrot.slane %v1769, %v1772
      %v1774 = vadd.f32 %v1667, %v1773
      %v1775 = vadd.f32 %v1671, %v1773
      %v1776 = vadd.f32 %v1679, %v1773
      %v1777 = vadd.f32 %v1685, %v1773
      %v1778 = vadd.f32 %v1693, %v1773
      %v1779 = vadd.f32 %v1697, %v1773
      %v1780 = vadd.f32 %v1705, %v1773
      %v1781 = vadd.f32 %v1711, %v1773
      %v1782 = vadd.f32 %v1719, %v1773
      %v1783 = vadd.f32 %v1723, %v1773
      %v1784 = vadd.f32 %v1731, %v1773
      %v1785 = vadd.f32 %v1737, %v1773
      %v1786 = vadd.f32 %v1745, %v1773
      %v1787 = vadd.f32 %v1749, %v1773
      %v1788 = vadd.f32 %v1757, %v1773
      %v1789 = vadd.f32 %v1763, %v1773
      %v1790 = vtanh.pop %v1774
      %v1791 = vtanh.pop %v1775
      %v1792 = vtanh.pop %v1776
      %v1793 = vtanh.pop %v1777
      %v1794 = vtanh.pop %v1778
      %v1795 = vtanh.pop %v1779
      %v1796 = vtanh.pop %v1780
      %v1797 = vtanh.pop %v1781
      %v1798 = vtanh.pop %v1782
      %v1799 = vtanh.pop %v1783
      %v1800 = vtanh.pop %v1784
      %v1801 = vtanh.pop %v1785
      %v1802 = vtanh.pop %v1786
      %v1803 = vtanh.pop %v1787
      %v1804 = vtanh.pop %v1788
      %v1805 = vtanh.pop %v1789
      %v1806 = vld [vmem:[%s4 + $0x5] sm:$0x1]
      %v1807 = vlaneseq
      %v1808 = vshrl.u32 %v1807, 7
      %v1809 = vsub.s32 0, %v1808
      %v1810 = vrot.slane %v1806, %v1809
      %v1811 = vadd.f32 %v1669, %v1810
      %v1812 = vadd.f32 %v1673, %v1810
      %v1813 = vadd.f32 %v1681, %v1810
      %v1814 = vadd.f32 %v1687, %v1810
      %v1815 = vadd.f32 %v1695, %v1810
      %v1816 = vadd.f32 %v1699, %v1810
      %v1817 = vadd.f32 %v1707, %v1810
      %v1818 = vadd.f32 %v1713, %v1810
      %v1819 = vadd.f32 %v1721, %v1810
      %v1820 = vadd.f32 %v1725, %v1810
      %v1821 = vadd.f32 %v1733, %v1810
      %v1822 = vadd.f32 %v1739, %v1810
      %v1823 = vadd.f32 %v1747, %v1810
      %v1824 = vadd.f32 %v1751, %v1810
      %v1825 = vadd.f32 %v1759, %v1810
      %v1826 = vadd.f32 %v1765, %v1810
      %v1827 = vadd.f32 %v1811, %v771
      %v1828 = vadd.f32 %v1812, %v771
      %v1829 = vadd.f32 %v1813, %v775
      %v1830 = vadd.f32 %v1814, %v775
      %v1831 = vadd.f32 %v1815, %v779
      %v1832 = vadd.f32 %v1816, %v779
      %v1833 = vadd.f32 %v1817, %v783
      %v1834 = vadd.f32 %v1818, %v783
      %v1835 = vadd.f32 %v1819, %v787
      %v1836 = vadd.f32 %v1820, %v787
      %v1837 = vadd.f32 %v1821, %v791
      %v1838 = vadd.f32 %v1822, %v791
      %v1839 = vadd.f32 %v1823, %v795
      %v1840 = vadd.f32 %v1824, %v795
      %v1841 = vadd.f32 %v1825, %v799
      %v1842 = vadd.f32 %v1826, %v799
      %v1843 = vmax.f32 %v1827, 0.0
      %v1844 = vmax.f32 %v1828, 0.0
      %v1845 = vmax.f32 %v1829, 0.0
      %v1846 = vmax.f32 %v1830, 0.0
      %v1847 = vmax.f32 %v1831, 0.0
      %v1848 = vmax.f32 %v1832, 0.0
      %v1849 = vmax.f32 %v1833, 0.0
      %v1850 = vmax.f32 %v1834, 0.0
      %v1851 = vmax.f32 %v1835, 0.0
      %v1852 = vmax.f32 %v1836, 0.0
      %v1853 = vmax.f32 %v1837, 0.0
      %v1854 = vmax.f32 %v1838, 0.0
      %v1855 = vmax.f32 %v1839, 0.0
      %v1856 = vmax.f32 %v1840, 0.0
      %v1857 = vmax.f32 %v1841, 0.0
      %v1858 = vmax.f32 %v1842, 0.0
      %v1859 = vmul.f32 %v1790, %v1843
      %v1860 = vmul.f32 %v1791, %v1844
      %v1861 = vmul.f32 %v1792, %v1845
      %v1862 = vmul.f32 %v1793, %v1846
      %v1863 = vmul.f32 %v1794, %v1847
      %v1864 = vmul.f32 %v1795, %v1848
      %v1865 = vmul.f32 %v1796, %v1849
      %v1866 = vmul.f32 %v1797, %v1850
      %v1867 = vmul.f32 %v1798, %v1851
      %v1868 = vmul.f32 %v1799, %v1852
      %v1869 = vmul.f32 %v1800, %v1853
      %v1870 = vmul.f32 %v1801, %v1854
      %v1871 = vmul.f32 %v1802, %v1855
      %v1872 = vmul.f32 %v1803, %v1856
      %v1873 = vmul.f32 %v1804, %v1857
      %v1874 = vmul.f32 %v1805, %v1858
      %vm1875 = vcmask 1044480
      %v1876 = vsel %vm1875, %v1860, -inf
      %v1877 = vmax.f32 %v1859, %v1876
      %v1878 = vrot.slane %v1877, 4
      %v1879 = vmax.f32 %v1877, %v1878
      %v1880 = vrot.slane %v1879, 2
      %v1881 = vmax.f32 %v1879, %v1880
      %v1882 = vrot.slane %v1881, 1
      %v1883 = vmax.f32 %v1881, %v1882
      %v1884 = vsel %vm1875, %v1862, -inf
      %v1885 = vmax.f32 %v1861, %v1884
      %v1886 = vrot.slane %v1885, 4
      %v1887 = vmax.f32 %v1885, %v1886
      %v1888 = vrot.slane %v1887, 2
      %v1889 = vmax.f32 %v1887, %v1888
      %v1890 = vrot.slane %v1889, 1
      %v1891 = vmax.f32 %v1889, %v1890
      %v1892 = vsel %vm1875, %v1864, -inf
      %v1893 = vmax.f32 %v1863, %v1892
      %v1894 = vrot.slane %v1893, 4
      %v1895 = vmax.f32 %v1893, %v1894
      %v1896 = vrot.slane %v1895, 2
      %v1897 = vmax.f32 %v1895, %v1896
      %v1898 = vrot.slane %v1897, 1
      %v1899 = vmax.f32 %v1897, %v1898
      %v1900 = vsel %vm1875, %v1866, -inf
      %v1901 = vmax.f32 %v1865, %v1900
      %v1902 = vrot.slane %v1901, 4
      %v1903 = vmax.f32 %v1901, %v1902
      %v1904 = vrot.slane %v1903, 2
      %v1905 = vmax.f32 %v1903, %v1904
      %v1906 = vrot.slane %v1905, 1
      %v1907 = vmax.f32 %v1905, %v1906
      %v1908 = vsel %vm1875, %v1868, -inf
      %v1909 = vmax.f32 %v1867, %v1908
      %v1910 = vrot.slane %v1909, 4
      %v1911 = vmax.f32 %v1909, %v1910
      %v1912 = vrot.slane %v1911, 2
      %v1913 = vmax.f32 %v1911, %v1912
      %v1914 = vrot.slane %v1913, 1
      %v1915 = vmax.f32 %v1913, %v1914
      %v1916 = vsel %vm1875, %v1870, -inf
      %v1917 = vmax.f32 %v1869, %v1916
      %v1918 = vrot.slane %v1917, 4
      %v1919 = vmax.f32 %v1917, %v1918
      %v1920 = vrot.slane %v1919, 2
      %v1921 = vmax.f32 %v1919, %v1920
      %v1922 = vrot.slane %v1921, 1
      %v1923 = vmax.f32 %v1921, %v1922
      %v1924 = vsel %vm1875, %v1872, -inf
      %v1925 = vmax.f32 %v1871, %v1924
      %v1926 = vrot.slane %v1925, 4
      %v1927 = vmax.f32 %v1925, %v1926
      %v1928 = vrot.slane %v1927, 2
      %v1929 = vmax.f32 %v1927, %v1928
      %v1930 = vrot.slane %v1929, 1
      %v1931 = vmax.f32 %v1929, %v1930
      %v1932 = vsel %vm1875, %v1874, -inf
      %v1933 = vmax.f32 %v1873, %v1932
      %v1934 = vrot.slane %v1933, 4
      %v1935 = vmax.f32 %v1933, %v1934
      %v1936 = vrot.slane %v1935, 2
      %v1937 = vmax.f32 %v1935, %v1936
      %v1938 = vrot.slane %v1937, 1
      %v1939 = vmax.f32 %v1937, %v1938
      %v1940 = vld [vmem:[%s5 + $0x100] sm:$0xff]
      %v1941 = vld [vmem:[%s5 + $0x108] sm:$0xff]
      %v1942 = vld [vmem:[%s5 + $0x110] sm:$0xff]
      %v1943 = vld [vmem:[%s5 + $0x118] sm:$0xff]
      %v1944 = vld [vmem:[%s5 + $0x120] sm:$0xff]
      %v1945 = vld [vmem:[%s5 + $0x128] sm:$0xff]
      %v1946 = vld [vmem:[%s5 + $0x130] sm:$0xff]
      %v1947 = vld [vmem:[%s5 + $0x138] sm:$0xff]
      %v1948 = vld [vmem:[%s5 + $0x140] sm:$0xff]
      %v1949 = vld [vmem:[%s5 + $0x148] sm:$0xff]
      %v1950 = vld [vmem:[%s5 + $0x150] sm:$0xff]
      %v1951 = vld [vmem:[%s5 + $0x158] sm:$0xff]
      %v1952 = vld [vmem:[%s5 + $0x160] sm:$0xff]
      %v1953 = vld [vmem:[%s5 + $0x168] sm:$0xff]
      %v1954 = vld [vmem:[%s5 + $0x170] sm:$0xff]
      %v1955 = vld [vmem:[%s5 + $0x178] sm:$0xff]
      %v1964 = vsel %vm1365, %v1891, %v1883
      %v1965 = vsel %vm1367, %v1899, %v1964
      %v1966 = vsel %vm1369, %v1907, %v1965
      %v1967 = vsel %vm1371, %v1915, %v1966
      %v1968 = vsel %vm1373, %v1923, %v1967
      %v1969 = vsel %vm1375, %v1931, %v1968
      %v1970 = vsel %vm1377, %v1939, %v1969
      %1972 = vmatprep.subr.mxu0 0.0
      %1973 = vmatpush1.msra.mxu0 %v1955
      %1974 = vmatprep.subr.mxu0 0.0
      %1975 = vmatpush1.msra.mxu0 %v1954
      %1976 = vmatprep.subr.mxu0 0.0
      %1977 = vmatpush1.msra.mxu0 %v1953
      %1978 = vmatprep.subr.mxu0 0.0
      %1979 = vmatpush1.msra.mxu0 %v1952
      %1980 = vmatprep.subr.mxu0 0.0
      %1981 = vmatpush1.msra.mxu0 %v1951
      %1982 = vmatprep.subr.mxu0 0.0
      %1983 = vmatpush1.msra.mxu0 %v1950
      %1984 = vmatprep.subr.mxu0 0.0
      %1985 = vmatpush1.msra.mxu0 %v1949
      %1986 = vmatprep.subr.mxu0 0.0
      %1987 = vmatpush1.msra.mxu0 %v1948
      %1988 = vmatprep.subr.mxu0 0.0
      %1989 = vmatpush1.msra.mxu0 %v1947
      %1990 = vmatprep.subr.mxu0 0.0
      %1991 = vmatpush1.msra.mxu0 %v1946
      %1992 = vmatprep.subr.mxu0 0.0
      %1993 = vmatpush1.msra.mxu0 %v1945
      %1994 = vmatprep.subr.mxu0 0.0
      %1995 = vmatpush1.msra.mxu0 %v1944
      %1996 = vmatprep.subr.mxu0 0.0
      %1997 = vmatpush1.msra.mxu0 %v1943
      %1998 = vmatprep.subr.mxu0 0.0
      %1999 = vmatpush1.msra.mxu0 %v1942
      %2000 = vmatprep.subr.mxu0 0.0
      %2001 = vmatpush1.msra.mxu0 %v1941
      %2002 = vmatprep.subr.mxu0 0.0
      %2003 = vmatpush1.msra.mxu0 %v1940
      %2004 = vmatprep.subr.mxu0 0.0
      %2005 = vmatpush2.msra.mxu0 0.0
      %2006 = vmatprep.subr.mxu0 0.0
      %2007 = vmatpush2.msra.mxu0 0.0
      %2008 = vmatprep.subr.mxu0 0.0
      %2009 = vmatpush2.msra.mxu0 0.0
      %2010 = vmatprep.subr.mxu0 0.0
      %2011 = vmatpush2.msra.mxu0 0.0
      %2012 = vmatprep.subr.mxu0 0.0
      %2013 = vmatpush2.msra.mxu0 0.0
      %2014 = vmatprep.subr.mxu0 0.0
      %2015 = vmatpush2.msra.mxu0 0.0
      %2016 = vmatprep.subr.mxu0 0.0
      %2017 = vmatpush2.msra.mxu0 0.0
      %2018 = vmatprep.subr.mxu0 0.0
      %2019 = vmatpush2.msra.mxu0 0.0
      %2020 = vmatprep.subr.mxu0 0.0
      %2021 = vmatpush2.msra.mxu0 0.0
      %2022 = vmatprep.subr.mxu0 0.0
      %2023 = vmatpush2.msra.mxu0 0.0
      %2024 = vmatprep.subr.mxu0 0.0
      %2025 = vmatpush2.msra.mxu0 0.0
      %2026 = vmatprep.subr.mxu0 0.0
      %2027 = vmatpush2.msra.mxu0 0.0
      %2028 = vmatprep.subr.mxu0 0.0
      %2029 = vmatpush2.msra.mxu0 0.0
      %2030 = vmatprep.subr.mxu0 0.0
      %2031 = vmatpush2.msra.mxu0 0.0
      %2032 = vmatprep.subr.mxu0 0.0
      %2033 = vmatpush2.msra.mxu0 0.0
      %2034 = vmatprep.subr.mxu0 0.0
      %2035 = vmatpush2.msra.mxu0 0.0
      %2036 = vmatprep.mubr.f32.mxu0 0.0
      %2037 = vmatmul.mubr.f32.gmra.mxu0 %v1970
      %v2038 = vpop.f32.mrf.mxu0
      %v2039 = vadd.f32 0.0, %v2038
      %v2040 = vpop.f32.mrf.mxu0
      %2041 = vdwg.mxu0
      %v2042 = vadd.f32 %v1533, %v2039
      %v2043 = vld [vmem:[%s4 + $0x6] sm:$0x1]
      %v2044 = vlaneseq
      %v2045 = vshrl.u32 %v2044, 7
      %v2046 = vsub.s32 0, %v2045
      %v2047 = vrot.slane %v2043, %v2046
      %v2048 = vadd.f32 %v2042, %v2047
      %2049 = vst [vmem:[%s268] sm:$0xff] %v2048
      %p2050 = scmp.lt.s32.totalorder %s17, 1
      %s2051 = scalar_select %p2050, %s17, 1
      %s2052 = smul.addr %s2051, 8
      %s2053 = scalar_lea.vmem %s6, %s2052
      // Predicated region
      $region45: #{gcae_forward.1} parent=43 // pred_check
        %p2054 = pneg %p171
      $region46: #{gcae_forward.1} parent=43 // pred_check_branch
        %2056 = sbr.rel (%p2054) target = $region48
      $region47: #{gcae_forward.1} parent=43 // pred_region
        _
      $region48: #{gcae_forward.1} parent=43 // pred_fallthru
        _
    $region44: #{gcae_forward.1} parent=5 // pred_fallthru
      _
    %p2057 = scmp.le.s32.totalorder 2, %s12
    // Predicated region
    $region49: #{gcae_forward.1} parent=5 // pred_check
      %p2058 = pneg %p2057
    $region50: #{gcae_forward.1} parent=5 // pred_check_branch
      %2060 = sbr.rel (%p2058) target = $region52
    $region51: #{gcae_forward.1} parent=5 // pred_region
      %s2061 = ssub.s32 %s12, 2
      // Predicated region
      $region53: #{gcae_forward.1} parent=51 // pred_check
        %p2062 = pneg %p177
      $region54: #{gcae_forward.1} parent=51 // pred_check_branch
        %2064 = sbr.rel (%p2062) target = $region56
      $region55: #{gcae_forward.1} parent=51 // pred_region
        %p2065 = scmp.lt.s32.totalorder %s18, 1
        %s2066 = scalar_select %p2065, %s18, 1
        %s2067 = smul.addr %s2066, 8
        %s2068 = scalar_lea.vmem %s6, %s2067
      $region56: #{gcae_forward.1} parent=51 // pred_fallthru
        _
    $region52: #{gcae_forward.1} parent=5 // pred_fallthru
      _
  $region6: #{gcae_forward.1} parent=0 // loop_footer
    %s16 = sadd.s32 1, %s12
  $region7: #{gcae_forward.1} parent=0 // loop_footer_branch
    %11 = sbr.rel target = $region3
  $region8: #{gcae_forward.1} parent=0 // loop_exit
    _

</llo_original>
